<compile_context>
chip_gen: v7x
topology: tpu7x:2x2x1
jax: 0.10.0
libtpu: 0.0.40
codegen_flags: <defaults>
</compile_context>

<pallas_src>
import functools

import jax
import jax.numpy as jnp
from jax.experimental import pallas as pl
from jax.experimental.pallas import tpu as pltpu


def _round_up(x, m):
    return ((x + m - 1) // m) * m


def _const_spec(shape):
    nd = len(shape)
    return pl.BlockSpec(shape, lambda i, _nd=nd: (0,) * _nd)


# ----------------------------------------------------------------------------
# Fused dual-GRU kernel: one grid step = one block of time steps, both GRUs.
# PyTorch gate order (r, z, n):
#   r = sig(gx_r + gh_r) ; z = sig(gx_z + gh_z)
#   n = tanh(gx_n + r * gh_n) ; h' = (1-z)*n + z*h
# where gx = x @ W_ih^T + b_ih (hoisted, one matmul per GRU per block)
#       gh = h @ W_hh^T + b_hh (per step, fused 3H-wide matmul)
# ----------------------------------------------------------------------------
def dual_gru_kernel(xq_ref, xc_ref,
                    wihq_ref, whhq_ref, bihq_ref, bhhq_ref,
                    wihc_ref, whhc_ref, bihc_ref, bhhc_ref,
                    oq_ref, oc_ref,
                    hq_ref, hc_ref, gxq_ref, gxc_ref, *, unroll_steps):
    # xq_ref : (t_block*B, Dq) bf16   time-major flattened rows (question GRU)
    # xc_ref : (t_block*B, Dc) bf16   (concept GRU)
    # wih*   : (Din, 3H) bf16, whh*: (H, 3H) bf16, bih*/bhh*: (1, 3H) f32
    # oq/oc  : (t_block, B, H) f32
    # hq/hc  : (B, H) f32 scratch (persist across grid steps)
    # gxq/gxc: (t_block*B, 3H) f32 scratch
    t_block, B, H = oq_ref.shape

    @pl.when(pl.program_id(0) == 0)
    def _():
        hq_ref[...] = jnp.zeros_like(hq_ref)
        hc_ref[...] = jnp.zeros_like(hc_ref)

    # Hoisted input-side gate matmuls for the whole time block.
    gxq_ref[...] = (
        jnp.dot(xq_ref[...], wihq_ref[...], preferred_element_type=jnp.float32)
        + bihq_ref[...])
    gxc_ref[...] = (
        jnp.dot(xc_ref[...], wihc_ref[...], preferred_element_type=jnp.float32)
        + bihc_ref[...])

    whhq = whhq_ref[...]
    bhhq = bhhq_ref[...]
    whhc = whhc_ref[...]
    bhhc = bhhc_ref[...]

    def gates(gx, gh, h):
        r = jax.nn.sigmoid(gx[:, 0:H] + gh[:, 0:H])
        z = jax.nn.sigmoid(gx[:, H:2 * H] + gh[:, H:2 * H])
        n = jnp.tanh(gx[:, 2 * H:3 * H] + r * gh[:, 2 * H:3 * H])
        return (1.0 - z) * n + z * h

    def step(i, carry):
        hq, hc = carry
        ghq = jnp.dot(hq.astype(jnp.bfloat16), whhq,
                      preferred_element_type=jnp.float32) + bhhq
        ghc = jnp.dot(hc.astype(jnp.bfloat16), whhc,
                      preferred_element_type=jnp.float32) + bhhc
        row = i * B
        hq_new = gates(gxq_ref[pl.ds(row, B), :], ghq, hq)
        hc_new = gates(gxc_ref[pl.ds(row, B), :], ghc, hc)
        oq_ref[i] = hq_new
        oc_ref[i] = hc_new
        return (hq_new, hc_new)

    if unroll_steps:
        # Statically unrolled: gives the scheduler full visibility for short
        # fixed trip counts.
        hq, hc = hq_ref[...], hc_ref[...]
        for i in range(t_block):
            hq, hc = step(i, (hq, hc))
        hq_f, hc_f = hq, hc
    else:
        hq_f, hc_f = jax.lax.fori_loop(0, t_block, step,
                                       (hq_ref[...], hc_ref[...]))
    hq_ref[...] = hq_f
    hc_ref[...] = hc_f


def dual_gru_forward(xq_t, xc_t, gru_q_params, gru_c_params, *, t_block=32):
    """xq_t: (S, B, Dq), xc_t: (S, B, Dc) f32 time-major.
    gru_*_params: PyTorch-convention (w_ih (3H,Din), w_hh (3H,H), b_ih, b_hh).
    Returns two (S, B, H) f32 hidden sequences (h0 = 0)."""
    S, B, Dq = xq_t.shape
    Dc = xc_t.shape[-1]
    H = gru_q_params[1].shape[1]

    def prep(w_ih, w_hh, b_ih, b_hh):
        return (w_ih.T.astype(jnp.bfloat16),            # (Din, 3H) cols [r|z|n]
                w_hh.T.astype(jnp.bfloat16),            # (H, 3H)
                b_ih.reshape(1, 3 * H).astype(jnp.float32),
                b_hh.reshape(1, 3 * H).astype(jnp.float32))

    wihq, whhq, bihq, bhhq = prep(*gru_q_params)
    wihc, whhc, bihc, bhhc = prep(*gru_c_params)

    t_block = max(1, min(t_block, S))
    if t_block < S:
        # Tiled row blocks need (t_block*B) % 8 == 0 for the 2D BlockSpec.
        while t_block > 1 and (t_block * B) % 8 != 0:
            t_block -= 1
        if (t_block * B) % 8 != 0:
            t_block = S
    n_blk = pl.cdiv(S, t_block)
    Sp = n_blk * t_block
    if Sp != S:
        xq_t = jnp.pad(xq_t, ((0, Sp - S), (0, 0), (0, 0)))
        xc_t = jnp.pad(xc_t, ((0, Sp - S), (0, 0), (0, 0)))
    xq2d = xq_t.reshape(Sp * B, Dq).astype(jnp.bfloat16)
    xc2d = xc_t.reshape(Sp * B, Dc).astype(jnp.bfloat16)

    unroll_steps = t_block <= 16

    yq, yc = pl.pallas_call(
        functools.partial(dual_gru_kernel, unroll_steps=unroll_steps),
        out_shape=(jax.ShapeDtypeStruct((Sp, B, H), jnp.float32),
                   jax.ShapeDtypeStruct((Sp, B, H), jnp.float32)),
        grid=(n_blk,),
        in_specs=[
            pl.BlockSpec((t_block * B, Dq), lambda t: (t, 0)),
            pl.BlockSpec((t_block * B, Dc), lambda t: (t, 0)),
            pl.BlockSpec((Dq, 3 * H), lambda t: (0, 0)),
            pl.BlockSpec((H, 3 * H), lambda t: (0, 0)),
            pl.BlockSpec((1, 3 * H), lambda t: (0, 0)),
            pl.BlockSpec((1, 3 * H), lambda t: (0, 0)),
            pl.BlockSpec((Dc, 3 * H), lambda t: (0, 0)),
            pl.BlockSpec((H, 3 * H), lambda t: (0, 0)),
            pl.BlockSpec((1, 3 * H), lambda t: (0, 0)),
            pl.BlockSpec((1, 3 * H), lambda t: (0, 0)),
        ],
        out_specs=(pl.BlockSpec((t_block, B, H), lambda t: (t, 0, 0)),
                   pl.BlockSpec((t_block, B, H), lambda t: (t, 0, 0))),
        scratch_shapes=[
            pltpu.VMEM((B, H), jnp.float32),
            pltpu.VMEM((B, H), jnp.float32),
            pltpu.VMEM((t_block * B, 3 * H), jnp.float32),
            pltpu.VMEM((t_block * B, 3 * H), jnp.float32),
        ],
        # Time axis MUST stay "arbitrary": hidden-state scratch carries across
        # grid steps.
        compiler_params=pltpu.CompilerParams(
            dimension_semantics=("arbitrary",)),
    )(xq2d, xc2d, wihq, whhq, bihq, bhhq, wihc, whhc, bihc, bhhc)
    return yq[:S], yc[:S]


# ----------------------------------------------------------------------------
# Fused prediction kernel: 4 MLP heads + sigmoid + question/concept gathers
# (one-hot multiply + lane reduce) + masked concept mean + IRT combination.
# One row-tile of N = (T-1)*B rows per grid step.
# ----------------------------------------------------------------------------
def predict_kernel(qid_ref, cid_ref, cmask_ref, latq_ref, latc_ref, qcn_ref,
                   qn_wh, qn_bh, qn_wo, qn_bo,
                   qa_wh, qa_bh, qa_wo, qa_bo,
                   cn_wh, cn_bh, cn_wo, cn_bo,
                   ca_wh, ca_bh, ca_wo, ca_bo,
                   out_ref, *, lambda_q_all, lambda_c_all, lambda_c_next):
    tile = latq_ref.shape[0]
    num_q = qa_wo.shape[1]
    num_c = ca_wo.shape[1]
    M = cid_ref.shape[1]

    latq = latq_ref[...]           # (tile, D) bf16
    latc = latc_ref[...]           # (tile, D) bf16
    qcn = qcn_ref[...]             # (tile, 2D) bf16

    def mlp_sigmoid(x, wh, bh, wo, bo):
        h = x
        for l in range(wh.shape[0]):
            h = jnp.maximum(
                jnp.dot(h.astype(jnp.bfloat16), wh[l],
                        preferred_element_type=jnp.float32) + bh[l], 0.0)
        y = jnp.dot(h.astype(jnp.bfloat16), wo[...],
                    preferred_element_type=jnp.float32) + bo[...]
        return jax.nn.sigmoid(y)

    ps_q_next = mlp_sigmoid(jnp.concatenate([qcn, latq], axis=-1),
                            qn_wh, qn_bh, qn_wo, qn_bo)          # (tile, 1)
    ps_q_all = mlp_sigmoid(latq, qa_wh, qa_bh, qa_wo, qa_bo)     # (tile, Q)
    ps_c_next = mlp_sigmoid(jnp.concatenate([qcn, latc], axis=-1),
                            cn_wh, cn_bh, cn_wo, cn_bo)          # (tile, C)
    ps_c_all = mlp_sigmoid(latc, ca_wh, ca_bh, ca_wo, ca_bo)     # (tile, C)

    # gather question score at the next question id (one-hot + lane reduce)
    qid = qid_ref[...]                                           # (tile, 1)
    q_iota = jax.lax.broadcasted_iota(jnp.int32, (tile, num_q), 1)
    q_onehot = (q_iota == qid).astype(jnp.float32)
    ps_q_all_g = jnp.sum(ps_q_all * q_onehot, axis=-1, keepdims=True)

    # concept gather + masked mean over mapped concepts
    cmask = cmask_ref[...]                                       # (tile, M)
    cids = cid_ref[...]                                          # (tile, M)
    c_iota = jax.lax.broadcasted_iota(jnp.int32, (tile, num_c), 1)
    cweight = jnp.zeros((tile, num_c), jnp.float32)
    for m in range(M):
        cweight = cweight + cmask[:, m:m + 1] * (
            c_iota == cids[:, m:m + 1]).astype(jnp.float32)
    mask_sum = jnp.maximum(jnp.sum(cmask, axis=-1, keepdims=True), 1e-8)
    ps_c_next_g = jnp.sum(ps_c_next * cweight, axis=-1, keepdims=True) / mask_sum
    ps_c_all_g = jnp.sum(ps_c_all * cweight, axis=-1, keepdims=True) / mask_sum

    def sigmoid_inverse(v):
        return jnp.log(v / (1.0 - v + 1e-8) + 1e-8)

    logit = (sigmoid_inverse(ps_q_all_g) * lambda_q_all
             + sigmoid_inverse(ps_c_all_g) * lambda_c_all
             + sigmoid_inverse(ps_c_next_g) * lambda_c_next)
    predict_score = jax.nn.sigmoid(logit)

    pad = jnp.zeros((tile, 3), jnp.float32)
    out_ref[...] = jnp.concatenate(
        [predict_score, ps_q_next, ps_q_all_g, ps_c_next_g, ps_c_all_g, pad],
        axis=-1)


def fused_predict(latq, latc, qcn, qid, cids, cmask, mlp_params,
                  lambda_q_all, lambda_c_all, lambda_c_next, *, max_tile=512):
    N, D = latq.shape
    M = cids.shape[1]
    tile = min(max_tile, _round_up(N, 8))
    Npad = _round_up(N, tile)

    def padrows(a):
        return a if Npad == N else jnp.pad(a, ((0, Npad - N), (0, 0)))

    latq_p = padrows(latq).astype(jnp.bfloat16)
    latc_p = padrows(latc).astype(jnp.bfloat16)
    qcn_p = padrows(qcn).astype(jnp.bfloat16)
    qid_p = padrows(qid)
    cids_p = padrows(cids)
    cmask_p = padrows(cmask)

    weight_args, weight_specs = [], []
    for head in ("q_next", "q_all", "c_next", "c_all"):
        wh, bh, wo, bo = mlp_params[head]
        for w, to_bf16 in ((wh, True), (bh, False), (wo, True), (bo, False)):
            w = w.astype(jnp.bfloat16) if to_bf16 else w
            weight_args.append(w)
            weight_specs.append(_const_spec(w.shape))

    kernel = functools.partial(
        predict_kernel,
        lambda_q_all=float(lambda_q_all),
        lambda_c_all=float(lambda_c_all),
        lambda_c_next=float(lambda_c_next))

    out = pl.pallas_call(
        kernel,
        out_shape=jax.ShapeDtypeStruct((Npad, 8), jnp.float32),
        grid=(Npad // tile,),
        in_specs=[
            pl.BlockSpec((tile, 1), lambda i: (i, 0)),
            pl.BlockSpec((tile, M), lambda i: (i, 0)),
            pl.BlockSpec((tile, M), lambda i: (i, 0)),
            pl.BlockSpec((tile, D), lambda i: (i, 0)),
            pl.BlockSpec((tile, D), lambda i: (i, 0)),
            pl.BlockSpec((tile, 2 * D), lambda i: (i, 0)),
        ] + weight_specs,
        out_specs=pl.BlockSpec((tile, 8), lambda i: (i, 0)),
        compiler_params=pltpu.CompilerParams(
            dimension_semantics=("parallel",)),
    )(qid_p, cids_p, cmask_p, latq_p, latc_p, qcn_p, *weight_args)
    return out[:N]


# ----------------------------------------------------------------------------
# Parameter construction (deterministic, synthetic)
# ----------------------------------------------------------------------------
def init_linear(key, din, dout, scale=0.1):
    kw, kb = jax.random.split(key)
    w = jax.random.normal(kw, (din, dout), jnp.float32) * scale
    b = jax.random.normal(kb, (dout,), jnp.float32) * scale
    return w, b


def init_mlp(key, num_layer, din, dout):
    # num_layer >= 1 assumed (QIKT config uses 1).
    keys = jax.random.split(key, num_layer + 1)
    whs, bhs = [], []
    for l in range(num_layer):
        w, b = init_linear(keys[l], din, din)
        whs.append(w)
        bhs.append(b.reshape(1, din))
    wo, bo = init_linear(keys[-1], din, dout)
    return (jnp.stack(whs, 0), jnp.stack(bhs, 0), wo, bo.reshape(1, dout))


def init_gru(key, din, h, scale=0.1):
    k1, k2, k3, k4 = jax.random.split(key, 4)
    w_ih = jax.random.normal(k1, (3 * h, din), jnp.float32) * scale
    w_hh = jax.random.normal(k2, (3 * h, h), jnp.float32) * scale
    b_ih = jax.random.normal(k3, (3 * h,), jnp.float32) * scale
    b_hh = jax.random.normal(k4, (3 * h,), jnp.float32) * scale
    return w_ih, w_hh, b_ih, b_hh


# ----------------------------------------------------------------------------
# QIKT forward (embedding gathers in XLA, hot paths in two Pallas kernels)
# ----------------------------------------------------------------------------
def qikt_forward(params, question_seq, correctness_seq,
                 q2c_transfer_table, q2c_mask_table,
                 lambda_q_all, lambda_c_next, lambda_c_all, dim_emb):
    B, T = question_seq.shape
    D = dim_emb

    # Time-major views: only the tiny (B, T) index/label arrays are transposed;
    # every large sequence tensor is built time-major from the start.
    q_t = question_seq.T                                    # (T, B)
    corr_t = correctness_seq.astype(jnp.float32).T          # (T, B)

    question_emb = params["E_question"][q_t]                # (T, B, D)
    c_ids_t = q2c_transfer_table[q_t]                       # (T, B, M)
    c_mask_t = q2c_mask_table[q_t].astype(jnp.float32)      # (T, B, M)
    c_emb_all = params["E_concept"][c_ids_t]                # (T, B, M, D)
    mask_sum_t = jnp.maximum(c_mask_t.sum(-1, keepdims=True), 1e-8)
    concept_emb = (c_emb_all * c_mask_t[..., None]).sum(-2) / mask_sum_t

    qc_emb = jnp.concatenate([question_emb, concept_emb], axis=-1)   # (T,B,2D)
    w0 = (1.0 - corr_t)[..., None]
    w1 = corr_t[..., None]
    qca_emb = jnp.concatenate([qc_emb * w0, qc_emb * w1], axis=-1)   # (T,B,4D)
    ca_emb = jnp.concatenate([concept_emb * w0, concept_emb * w1], axis=-1)

    # Fused dual-GRU encoders (dropout_layer = identity in eval)
    latent_q, latent_c = dual_gru_forward(
        qca_emb[:-1], ca_emb[:-1], params["gru_q"], params["gru_c"])  # (T-1,B,D)

    S = T - 1
    N = S * B
    latq = latent_q.reshape(N, D)
    latc = latent_c.reshape(N, D)
    qcn = qc_emb[1:].reshape(N, 2 * D)
    qid = q_t[1:].reshape(N, 1).astype(jnp.int32)
    cids = c_ids_t[1:].reshape(N, -1).astype(jnp.int32)
    cmask = c_mask_t[1:].reshape(N, -1)

    out = fused_predict(latq, latc, qcn, qid, cids, cmask, params["mlp"],
                        lambda_q_all, lambda_c_all, lambda_c_next)   # (N, 8)

    def col(j):
        return out[:, j].reshape(S, B).T                     # (B, T-1)

    # (predict_score, ps_q_next, ps_q_all_gathered, ps_c_next_gathered,
    #  ps_c_all_gathered)  -- same as the PyTorch forward return order.
    return (col(0), col(1), col(2), col(3), col(4))


# TODO(synk): num_rnn_layer is fixed to 1 (stacked GRU layers would chain
#             dual_gru_forward calls); dropout layers are identity (eval mode).


if __name__ == "__main__":
    key = jax.random.PRNGKey(0)
    B, T = 2, 8
    dim_emb = 32
    num_question = 16
    num_concept = 8
    num_max_concept = 2
    num_mlp_layer = 1
    lambda_q_all, lambda_c_next, lambda_c_all = 1.0, 1.0, 1.0

    keys = jax.random.split(key, 12)
    params = {
        "E_question": jax.random.normal(keys[0], (num_question, dim_emb), jnp.float32) * 0.1,
        "E_concept": jax.random.normal(keys[1], (num_concept, dim_emb), jnp.float32) * 0.1,
        "gru_q": init_gru(keys[2], 4 * dim_emb, dim_emb),
        "gru_c": init_gru(keys[3], 2 * dim_emb, dim_emb),
        "mlp": {
            "q_next": init_mlp(keys[4], num_mlp_layer, 3 * dim_emb, 1),
            "q_all": init_mlp(keys[5], num_mlp_layer, dim_emb, num_question),
            "c_next": init_mlp(keys[6], num_mlp_layer, 3 * dim_emb, num_concept),
            "c_all": init_mlp(keys[7], num_mlp_layer, dim_emb, num_concept),
        },
    }

    # deterministic synthetic dataset tables
    q_idx = jnp.arange(num_question)
    q2c_transfer_table = jnp.stack(
        [(q_idx * num_max_concept + m) % num_concept for m in range(num_max_concept)],
        axis=-1).astype(jnp.int32)                                   # (Q, M)
    q2c_mask_table = jnp.stack(
        [jnp.ones_like(q_idx), (q_idx % 2 == 0).astype(jnp.int32)], axis=-1
    ).astype(jnp.int32)                                              # (Q, M)

    question_seq = jax.random.randint(keys[8], (B, T), 0, num_question, dtype=jnp.int32)
    correctness_seq = jax.random.bernoulli(keys[9], 0.6, (B, T)).astype(jnp.float32)

    outs = qikt_forward(params, question_seq, correctness_seq,
                        q2c_transfer_table, q2c_mask_table,
                        lambda_q_all, lambda_c_next, lambda_c_all, dim_emb)
    outs = jax.block_until_ready(outs)

    predict_score = outs[0]
    assert predict_score.shape == (B, T - 1)
    assert all(o.shape == (B, T - 1) for o in outs)
    assert bool(jnp.all(jnp.isfinite(jnp.stack(outs))))
    print("KERNEL_OK")
</pallas_src>

<mosaic_0001>
module attributes {stable_mosaic.version = 11 : i64} {
  func.func @dual_gru_kernel(%arg0: i32, %arg1: memref<14x128xbf16, #tpu.memory_space<vmem>>, %arg2: memref<14x64xbf16, #tpu.memory_space<vmem>>, %arg3: memref<128x96xbf16, #tpu.memory_space<vmem>>, %arg4: memref<32x96xbf16, #tpu.memory_space<vmem>>, %arg5: memref<1x96xf32, #tpu.memory_space<vmem>>, %arg6: memref<1x96xf32, #tpu.memory_space<vmem>>, %arg7: memref<64x96xbf16, #tpu.memory_space<vmem>>, %arg8: memref<32x96xbf16, #tpu.memory_space<vmem>>, %arg9: memref<1x96xf32, #tpu.memory_space<vmem>>, %arg10: memref<1x96xf32, #tpu.memory_space<vmem>>, %arg11: memref<7x2x32xf32, #tpu.memory_space<vmem>>, %arg12: memref<7x2x32xf32, #tpu.memory_space<vmem>>, %arg13: memref<2x32xf32, #tpu.memory_space<vmem>>, %arg14: memref<2x32xf32, #tpu.memory_space<vmem>>, %arg15: memref<14x96xf32, #tpu.memory_space<vmem>>, %arg16: memref<14x96xf32, #tpu.memory_space<vmem>>) attributes {dimension_semantics = [#tpu.dimension_semantics<arbitrary>], iteration_bounds = array<i64: 1>, scalar_prefetch = 0 : i64, scratch_operands = 4 : i64, tpu.core_type = #tpu.core_type<tc>, window_params = [{transform_indices = @transform_0, window_bounds = array<i64: 14, 128>}, {transform_indices = @transform_1, window_bounds = array<i64: 14, 64>}, {pipeline_mode = #tpu.pipeline_mode<synchronous>, transform_indices = @transform_2, window_bounds = array<i64: 128, 96>}, {pipeline_mode = #tpu.pipeline_mode<synchronous>, transform_indices = @transform_3, window_bounds = array<i64: 32, 96>}, {pipeline_mode = #tpu.pipeline_mode<synchronous>, transform_indices = @transform_4, window_bounds = array<i64: 1, 96>}, {pipeline_mode = #tpu.pipeline_mode<synchronous>, transform_indices = @transform_5, window_bounds = array<i64: 1, 96>}, {pipeline_mode = #tpu.pipeline_mode<synchronous>, transform_indices = @transform_6, window_bounds = array<i64: 64, 96>}, {pipeline_mode = #tpu.pipeline_mode<synchronous>, transform_indices = @transform_7, window_bounds = array<i64: 32, 96>}, {pipeline_mode = #tpu.pipeline_mode<synchronous>, transform_indices = @transform_8, window_bounds = array<i64: 1, 96>}, {pipeline_mode = #tpu.pipeline_mode<synchronous>, transform_indices = @transform_9, window_bounds = array<i64: 1, 96>}, {transform_indices = @transform_10, window_bounds = array<i64: 7, 2, 32>}, {transform_indices = @transform_11, window_bounds = array<i64: 7, 2, 32>}]} {
    %c0_i32 = arith.constant 0 : i32
    %0 = arith.cmpi eq, %arg0, %c0_i32 : i32
    %1 = arith.extui %0 : i1 to i32
    %c0_i32_0 = arith.constant 0 : i32
    %2 = arith.cmpi ne, %1, %c0_i32_0 : i32
    scf.if %2 {
      %cst_150 = arith.constant 0.000000e+00 : f32
      %501 = vector.broadcast %cst_150 : f32 to vector<2x32xf32>
      %c0_151 = arith.constant 0 : index
      %c0_152 = arith.constant 0 : index
      %502 = vector.load %arg13[%c0_151, %c0_152] : memref<2x32xf32, #tpu.memory_space<vmem>>, vector<2x32xf32>
      tpu.vector_store %arg13[%c0_151, %c0_152], %501 {strides = array<i32>} : memref<2x32xf32, #tpu.memory_space<vmem>>, vector<2x32xf32>,
      %cst_153 = arith.constant 0.000000e+00 : f32
      %503 = vector.broadcast %cst_153 : f32 to vector<2x32xf32>
      %c0_154 = arith.constant 0 : index
      %c0_155 = arith.constant 0 : index
      %504 = vector.load %arg14[%c0_154, %c0_155] : memref<2x32xf32, #tpu.memory_space<vmem>>, vector<2x32xf32>
      tpu.vector_store %arg14[%c0_154, %c0_155], %503 {strides = array<i32>} : memref<2x32xf32, #tpu.memory_space<vmem>>, vector<2x32xf32>,
    } else {
    }
    %c0 = arith.constant 0 : index
    %c0_1 = arith.constant 0 : index
    %3 = vector.load %arg1[%c0, %c0_1] : memref<14x128xbf16, #tpu.memory_space<vmem>>, vector<14x128xbf16>
    %c0_2 = arith.constant 0 : index
    %c0_3 = arith.constant 0 : index
    %4 = vector.load %arg3[%c0_2, %c0_3] : memref<128x96xbf16, #tpu.memory_space<vmem>>, vector<128x96xbf16>
    %cst = arith.constant dense<0.000000e+00> : vector<14x96xf32>
    %5 = tpu.matmul %3, %4, %cst {dimension_numbers = #tpu.dot_dimension_numbers<[1], [0], [0], [1], [0, 0, 1, 1], [], []>} : vector<14x128xbf16>, vector<128x96xbf16>, vector<14x96xf32> -> vector<14x96xf32>
    %c0_4 = arith.constant 0 : index
    %c0_5 = arith.constant 0 : index
    %6 = vector.load %arg5[%c0_4, %c0_5] : memref<1x96xf32, #tpu.memory_space<vmem>>, vector<1x96xf32>
    %7 = vector.broadcast %6 : vector<1x96xf32> to vector<14x96xf32>
    %8 = arith.addf %5, %7 : vector<14x96xf32>
    %c0_6 = arith.constant 0 : index
    %c0_7 = arith.constant 0 : index
    %9 = vector.load %arg15[%c0_6, %c0_7] : memref<14x96xf32, #tpu.memory_space<vmem>>, vector<14x96xf32>
    tpu.vector_store %arg15[%c0_6, %c0_7], %8 {strides = array<i32>} : memref<14x96xf32, #tpu.memory_space<vmem>>, vector<14x96xf32>,
    %c0_8 = arith.constant 0 : index
    %c0_9 = arith.constant 0 : index
    %10 = vector.load %arg2[%c0_8, %c0_9] : memref<14x64xbf16, #tpu.memory_space<vmem>>, vector<14x64xbf16>
    %c0_10 = arith.constant 0 : index
    %c0_11 = arith.constant 0 : index
    %11 = vector.load %arg7[%c0_10, %c0_11] : memref<64x96xbf16, #tpu.memory_space<vmem>>, vector<64x96xbf16>
    %cst_12 = arith.constant dense<0.000000e+00> : vector<14x96xf32>
    %12 = tpu.matmul %10, %11, %cst_12 {dimension_numbers = #tpu.dot_dimension_numbers<[1], [0], [0], [1], [0, 0, 1, 1], [], []>} : vector<14x64xbf16>, vector<64x96xbf16>, vector<14x96xf32> -> vector<14x96xf32>
    %c0_13 = arith.constant 0 : index
    %c0_14 = arith.constant 0 : index
    %13 = vector.load %arg9[%c0_13, %c0_14] : memref<1x96xf32, #tpu.memory_space<vmem>>, vector<1x96xf32>
    %14 = vector.broadcast %13 : vector<1x96xf32> to vector<14x96xf32>
    %15 = arith.addf %12, %14 : vector<14x96xf32>
    %c0_15 = arith.constant 0 : index
    %c0_16 = arith.constant 0 : index
    %16 = vector.load %arg16[%c0_15, %c0_16] : memref<14x96xf32, #tpu.memory_space<vmem>>, vector<14x96xf32>
    tpu.vector_store %arg16[%c0_15, %c0_16], %15 {strides = array<i32>} : memref<14x96xf32, #tpu.memory_space<vmem>>, vector<14x96xf32>,
    %c0_17 = arith.constant 0 : index
    %c0_18 = arith.constant 0 : index
    %17 = vector.load %arg4[%c0_17, %c0_18] : memref<32x96xbf16, #tpu.memory_space<vmem>>, vector<32x96xbf16>
    %c0_19 = arith.constant 0 : index
    %c0_20 = arith.constant 0 : index
    %18 = vector.load %arg6[%c0_19, %c0_20] : memref<1x96xf32, #tpu.memory_space<vmem>>, vector<1x96xf32>
    %c0_21 = arith.constant 0 : index
    %c0_22 = arith.constant 0 : index
    %19 = vector.load %arg8[%c0_21, %c0_22] : memref<32x96xbf16, #tpu.memory_space<vmem>>, vector<32x96xbf16>
    %c0_23 = arith.constant 0 : index
    %c0_24 = arith.constant 0 : index
    %20 = vector.load %arg10[%c0_23, %c0_24] : memref<1x96xf32, #tpu.memory_space<vmem>>, vector<1x96xf32>
    %c0_25 = arith.constant 0 : index
    %c0_26 = arith.constant 0 : index
    %21 = vector.load %arg13[%c0_25, %c0_26] : memref<2x32xf32, #tpu.memory_space<vmem>>, vector<2x32xf32>
    %c0_27 = arith.constant 0 : index
    %c0_28 = arith.constant 0 : index
    %22 = vector.load %arg14[%c0_27, %c0_28] : memref<2x32xf32, #tpu.memory_space<vmem>>, vector<2x32xf32>
    %23 = arith.truncf %21 : vector<2x32xf32> to vector<2x32xbf16>
    %cst_29 = arith.constant dense<0.000000e+00> : vector<2x96xf32>
    %24 = tpu.matmul %23, %17, %cst_29 {dimension_numbers = #tpu.dot_dimension_numbers<[1], [0], [0], [1], [0, 0, 1, 1], [], []>} : vector<2x32xbf16>, vector<32x96xbf16>, vector<2x96xf32> -> vector<2x96xf32>
    %25 = vector.broadcast %18 : vector<1x96xf32> to vector<2x96xf32>
    %26 = arith.addf %24, %25 : vector<2x96xf32>
    %27 = arith.truncf %22 : vector<2x32xf32> to vector<2x32xbf16>
    %cst_30 = arith.constant dense<0.000000e+00> : vector<2x96xf32>
    %28 = tpu.matmul %27, %19, %cst_30 {dimension_numbers = #tpu.dot_dimension_numbers<[1], [0], [0], [1], [0, 0, 1, 1], [], []>} : vector<2x32xbf16>, vector<32x96xbf16>, vector<2x96xf32> -> vector<2x96xf32>
    %29 = vector.broadcast %20 : vector<1x96xf32> to vector<2x96xf32>
    %30 = arith.addf %28, %29 : vector<2x96xf32>
    %c0_31 = arith.constant 0 : index
    %c0_32 = arith.constant 0 : index
    %31 = vector.load %arg15[%c0_31, %c0_32] : memref<14x96xf32, #tpu.memory_space<vmem>>, vector<2x96xf32>
    %32 = vector.extract_strided_slice %31 {offsets = [0, 0], sizes = [2, 32], strides = [1, 1]} : vector<2x96xf32> to vector<2x32xf32>
    %33 = vector.extract_strided_slice %26 {offsets = [0, 0], sizes = [2, 32], strides = [1, 1]} : vector<2x96xf32> to vector<2x32xf32>
    %34 = arith.addf %32, %33 : vector<2x32xf32>
    %35 = arith.negf %34 : vector<2x32xf32>
    %36 = math.exp %35 : vector<2x32xf32>
    %cst_33 = arith.constant 1.000000e+00 : f32
    %37 = vector.broadcast %cst_33 : f32 to vector<2x32xf32>
    %38 = arith.addf %37, %36 : vector<2x32xf32>
    %39 = arith.divf %37, %38 : vector<2x32xf32>
    %40 = vector.extract_strided_slice %31 {offsets = [0, 32], sizes = [2, 32], strides = [1, 1]} : vector<2x96xf32> to vector<2x32xf32>
    %41 = vector.extract_strided_slice %26 {offsets = [0, 32], sizes = [2, 32], strides = [1, 1]} : vector<2x96xf32> to vector<2x32xf32>
    %42 = arith.addf %40, %41 : vector<2x32xf32>
    %43 = arith.negf %42 : vector<2x32xf32>
    %44 = math.exp %43 : vector<2x32xf32>
    %cst_34 = arith.constant 1.000000e+00 : f32
    %45 = vector.broadcast %cst_34 : f32 to vector<2x32xf32>
    %46 = arith.addf %45, %44 : vector<2x32xf32>
    %47 = arith.divf %45, %46 : vector<2x32xf32>
    %48 = vector.extract_strided_slice %31 {offsets = [0, 64], sizes = [2, 32], strides = [1, 1]} : vector<2x96xf32> to vector<2x32xf32>
    %49 = vector.extract_strided_slice %26 {offsets = [0, 64], sizes = [2, 32], strides = [1, 1]} : vector<2x96xf32> to vector<2x32xf32>
    %50 = arith.mulf %39, %49 : vector<2x32xf32>
    %51 = arith.addf %48, %50 : vector<2x32xf32>
    %52 = math.tanh %51 : vector<2x32xf32>
    %cst_35 = arith.constant 1.000000e+00 : f32
    %53 = vector.broadcast %cst_35 : f32 to vector<2x32xf32>
    %54 = arith.subf %53, %47 : vector<2x32xf32>
    %55 = arith.mulf %54, %52 : vector<2x32xf32>
    %56 = arith.mulf %47, %21 : vector<2x32xf32>
    %57 = arith.addf %55, %56 : vector<2x32xf32>
    %c0_36 = arith.constant 0 : index
    %c0_37 = arith.constant 0 : index
    %58 = vector.load %arg16[%c0_36, %c0_37] : memref<14x96xf32, #tpu.memory_space<vmem>>, vector<2x96xf32>
    %59 = vector.extract_strided_slice %58 {offsets = [0, 0], sizes = [2, 32], strides = [1, 1]} : vector<2x96xf32> to vector<2x32xf32>
    %60 = vector.extract_strided_slice %30 {offsets = [0, 0], sizes = [2, 32], strides = [1, 1]} : vector<2x96xf32> to vector<2x32xf32>
    %61 = arith.addf %59, %60 : vector<2x32xf32>
    %62 = arith.negf %61 : vector<2x32xf32>
    %63 = math.exp %62 : vector<2x32xf32>
    %cst_38 = arith.constant 1.000000e+00 : f32
    %64 = vector.broadcast %cst_38 : f32 to vector<2x32xf32>
    %65 = arith.addf %64, %63 : vector<2x32xf32>
    %66 = arith.divf %64, %65 : vector<2x32xf32>
    %67 = vector.extract_strided_slice %58 {offsets = [0, 32], sizes = [2, 32], strides = [1, 1]} : vector<2x96xf32> to vector<2x32xf32>
    %68 = vector.extract_strided_slice %30 {offsets = [0, 32], sizes = [2, 32], strides = [1, 1]} : vector<2x96xf32> to vector<2x32xf32>
    %69 = arith.addf %67, %68 : vector<2x32xf32>
    %70 = arith.negf %69 : vector<2x32xf32>
    %71 = math.exp %70 : vector<2x32xf32>
    %cst_39 = arith.constant 1.000000e+00 : f32
    %72 = vector.broadcast %cst_39 : f32 to vector<2x32xf32>
    %73 = arith.addf %72, %71 : vector<2x32xf32>
    %74 = arith.divf %72, %73 : vector<2x32xf32>
    %75 = vector.extract_strided_slice %58 {offsets = [0, 64], sizes = [2, 32], strides = [1, 1]} : vector<2x96xf32> to vector<2x32xf32>
    %76 = vector.extract_strided_slice %30 {offsets = [0, 64], sizes = [2, 32], strides = [1, 1]} : vector<2x96xf32> to vector<2x32xf32>
    %77 = arith.mulf %66, %76 : vector<2x32xf32>
    %78 = arith.addf %75, %77 : vector<2x32xf32>
    %79 = math.tanh %78 : vector<2x32xf32>
    %cst_40 = arith.constant 1.000000e+00 : f32
    %80 = vector.broadcast %cst_40 : f32 to vector<2x32xf32>
    %81 = arith.subf %80, %74 : vector<2x32xf32>
    %82 = arith.mulf %81, %79 : vector<2x32xf32>
    %83 = arith.mulf %74, %22 : vector<2x32xf32>
    %84 = arith.addf %82, %83 : vector<2x32xf32>
    %c0_41 = arith.constant 0 : index
    %c0_42 = arith.constant 0 : index
    %c0_43 = arith.constant 0 : index
    %85 = vector.load %arg11[%c0_41, %c0_42, %c0_43] : memref<7x2x32xf32, #tpu.memory_space<vmem>>, vector<1x2x32xf32>
    %86 = vector.shape_cast %85 : vector<1x2x32xf32> to vector<2x32xf32>
    %87 = vector.shape_cast %57 : vector<2x32xf32> to vector<1x2x32xf32>
    tpu.vector_store %arg11[%c0_41, %c0_42, %c0_43], %87 {strides = array<i32>} : memref<7x2x32xf32, #tpu.memory_space<vmem>>, vector<1x2x32xf32>,
    %c0_44 = arith.constant 0 : index
    %c0_45 = arith.constant 0 : index
    %c0_46 = arith.constant 0 : index
    %88 = vector.load %arg12[%c0_44, %c0_45, %c0_46] : memref<7x2x32xf32, #tpu.memory_space<vmem>>, vector<1x2x32xf32>
    %89 = vector.shape_cast %88 : vector<1x2x32xf32> to vector<2x32xf32>
    %90 = vector.shape_cast %84 : vector<2x32xf32> to vector<1x2x32xf32>
    tpu.vector_store %arg12[%c0_44, %c0_45, %c0_46], %90 {strides = array<i32>} : memref<7x2x32xf32, #tpu.memory_space<vmem>>, vector<1x2x32xf32>,
    %91 = arith.truncf %57 : vector<2x32xf32> to vector<2x32xbf16>
    %cst_47 = arith.constant dense<0.000000e+00> : vector<2x96xf32>
    %92 = tpu.matmul %91, %17, %cst_47 {dimension_numbers = #tpu.dot_dimension_numbers<[1], [0], [0], [1], [0, 0, 1, 1], [], []>} : vector<2x32xbf16>, vector<32x96xbf16>, vector<2x96xf32> -> vector<2x96xf32>
    %93 = vector.broadcast %18 : vector<1x96xf32> to vector<2x96xf32>
    %94 = arith.addf %92, %93 : vector<2x96xf32>
    %95 = arith.truncf %84 : vector<2x32xf32> to vector<2x32xbf16>
    %cst_48 = arith.constant dense<0.000000e+00> : vector<2x96xf32>
    %96 = tpu.matmul %95, %19, %cst_48 {dimension_numbers = #tpu.dot_dimension_numbers<[1], [0], [0], [1], [0, 0, 1, 1], [], []>} : vector<2x32xbf16>, vector<32x96xbf16>, vector<2x96xf32> -> vector<2x96xf32>
    %97 = vector.broadcast %20 : vector<1x96xf32> to vector<2x96xf32>
    %98 = arith.addf %96, %97 : vector<2x96xf32>
    %c2 = arith.constant 2 : index
    %c0_49 = arith.constant 0 : index
    %99 = vector.load %arg15[%c2, %c0_49] : memref<14x96xf32, #tpu.memory_space<vmem>>, vector<2x96xf32>
    %100 = vector.extract_strided_slice %99 {offsets = [0, 0], sizes = [2, 32], strides = [1, 1]} : vector<2x96xf32> to vector<2x32xf32>
    %101 = vector.extract_strided_slice %94 {offsets = [0, 0], sizes = [2, 32], strides = [1, 1]} : vector<2x96xf32> to vector<2x32xf32>
    %102 = arith.addf %100, %101 : vector<2x32xf32>
    %103 = arith.negf %102 : vector<2x32xf32>
    %104 = math.exp %103 : vector<2x32xf32>
    %cst_50 = arith.constant 1.000000e+00 : f32
    %105 = vector.broadcast %cst_50 : f32 to vector<2x32xf32>
    %106 = arith.addf %105, %104 : vector<2x32xf32>
    %107 = arith.divf %105, %106 : vector<2x32xf32>
    %108 = vector.extract_strided_slice %99 {offsets = [0, 32], sizes = [2, 32], strides = [1, 1]} : vector<2x96xf32> to vector<2x32xf32>
    %109 = vector.extract_strided_slice %94 {offsets = [0, 32], sizes = [2, 32], strides = [1, 1]} : vector<2x96xf32> to vector<2x32xf32>
    %110 = arith.addf %108, %109 : vector<2x32xf32>
    %111 = arith.negf %110 : vector<2x32xf32>
    %112 = math.exp %111 : vector<2x32xf32>
    %cst_51 = arith.constant 1.000000e+00 : f32
    %113 = vector.broadcast %cst_51 : f32 to vector<2x32xf32>
    %114 = arith.addf %113, %112 : vector<2x32xf32>
    %115 = arith.divf %113, %114 : vector<2x32xf32>
    %116 = vector.extract_strided_slice %99 {offsets = [0, 64], sizes = [2, 32], strides = [1, 1]} : vector<2x96xf32> to vector<2x32xf32>
    %117 = vector.extract_strided_slice %94 {offsets = [0, 64], sizes = [2, 32], strides = [1, 1]} : vector<2x96xf32> to vector<2x32xf32>
    %118 = arith.mulf %107, %117 : vector<2x32xf32>
    %119 = arith.addf %116, %118 : vector<2x32xf32>
    %120 = math.tanh %119 : vector<2x32xf32>
    %cst_52 = arith.constant 1.000000e+00 : f32
    %121 = vector.broadcast %cst_52 : f32 to vector<2x32xf32>
    %122 = arith.subf %121, %115 : vector<2x32xf32>
    %123 = arith.mulf %122, %120 : vector<2x32xf32>
    %124 = arith.mulf %115, %57 : vector<2x32xf32>
    %125 = arith.addf %123, %124 : vector<2x32xf32>
    %c2_53 = arith.constant 2 : index
    %c0_54 = arith.constant 0 : index
    %126 = vector.load %arg16[%c2_53, %c0_54] : memref<14x96xf32, #tpu.memory_space<vmem>>, vector<2x96xf32>
    %127 = vector.extract_strided_slice %126 {offsets = [0, 0], sizes = [2, 32], strides = [1, 1]} : vector<2x96xf32> to vector<2x32xf32>
    %128 = vector.extract_strided_slice %98 {offsets = [0, 0], sizes = [2, 32], strides = [1, 1]} : vector<2x96xf32> to vector<2x32xf32>
    %129 = arith.addf %127, %128 : vector<2x32xf32>
    %130 = arith.negf %129 : vector<2x32xf32>
    %131 = math.exp %130 : vector<2x32xf32>
    %cst_55 = arith.constant 1.000000e+00 : f32
    %132 = vector.broadcast %cst_55 : f32 to vector<2x32xf32>
    %133 = arith.addf %132, %131 : vector<2x32xf32>
    %134 = arith.divf %132, %133 : vector<2x32xf32>
    %135 = vector.extract_strided_slice %126 {offsets = [0, 32], sizes = [2, 32], strides = [1, 1]} : vector<2x96xf32> to vector<2x32xf32>
    %136 = vector.extract_strided_slice %98 {offsets = [0, 32], sizes = [2, 32], strides = [1, 1]} : vector<2x96xf32> to vector<2x32xf32>
    %137 = arith.addf %135, %136 : vector<2x32xf32>
    %138 = arith.negf %137 : vector<2x32xf32>
    %139 = math.exp %138 : vector<2x32xf32>
    %cst_56 = arith.constant 1.000000e+00 : f32
    %140 = vector.broadcast %cst_56 : f32 to vector<2x32xf32>
    %141 = arith.addf %140, %139 : vector<2x32xf32>
    %142 = arith.divf %140, %141 : vector<2x32xf32>
    %143 = vector.extract_strided_slice %126 {offsets = [0, 64], sizes = [2, 32], strides = [1, 1]} : vector<2x96xf32> to vector<2x32xf32>
    %144 = vector.extract_strided_slice %98 {offsets = [0, 64], sizes = [2, 32], strides = [1, 1]} : vector<2x96xf32> to vector<2x32xf32>
    %145 = arith.mulf %134, %144 : vector<2x32xf32>
    %146 = arith.addf %143, %145 : vector<2x32xf32>
    %147 = math.tanh %146 : vector<2x32xf32>
    %cst_57 = arith.constant 1.000000e+00 : f32
    %148 = vector.broadcast %cst_57 : f32 to vector<2x32xf32>
    %149 = arith.subf %148, %142 : vector<2x32xf32>
    %150 = arith.mulf %149, %147 : vector<2x32xf32>
    %151 = arith.mulf %142, %84 : vector<2x32xf32>
    %152 = arith.addf %150, %151 : vector<2x32xf32>
    %c1 = arith.constant 1 : index
    %c0_58 = arith.constant 0 : index
    %c0_59 = arith.constant 0 : index
    %153 = vector.load %arg11[%c1, %c0_58, %c0_59] : memref<7x2x32xf32, #tpu.memory_space<vmem>>, vector<1x2x32xf32>
    %154 = vector.shape_cast %153 : vector<1x2x32xf32> to vector<2x32xf32>
    %155 = vector.shape_cast %125 : vector<2x32xf32> to vector<1x2x32xf32>
    tpu.vector_store %arg11[%c1, %c0_58, %c0_59], %155 {strides = array<i32>} : memref<7x2x32xf32, #tpu.memory_space<vmem>>, vector<1x2x32xf32>,
    %c1_60 = arith.constant 1 : index
    %c0_61 = arith.constant 0 : index
    %c0_62 = arith.constant 0 : index
    %156 = vector.load %arg12[%c1_60, %c0_61, %c0_62] : memref<7x2x32xf32, #tpu.memory_space<vmem>>, vector<1x2x32xf32>
    %157 = vector.shape_cast %156 : vector<1x2x32xf32> to vector<2x32xf32>
    %158 = vector.shape_cast %152 : vector<2x32xf32> to vector<1x2x32xf32>
    tpu.vector_store %arg12[%c1_60, %c0_61, %c0_62], %158 {strides = array<i32>} : memref<7x2x32xf32, #tpu.memory_space<vmem>>, vector<1x2x32xf32>,
    %159 = arith.truncf %125 : vector<2x32xf32> to vector<2x32xbf16>
    %cst_63 = arith.constant dense<0.000000e+00> : vector<2x96xf32>
    %160 = tpu.matmul %159, %17, %cst_63 {dimension_numbers = #tpu.dot_dimension_numbers<[1], [0], [0], [1], [0, 0, 1, 1], [], []>} : vector<2x32xbf16>, vector<32x96xbf16>, vector<2x96xf32> -> vector<2x96xf32>
    %161 = vector.broadcast %18 : vector<1x96xf32> to vector<2x96xf32>
    %162 = arith.addf %160, %161 : vector<2x96xf32>
    %163 = arith.truncf %152 : vector<2x32xf32> to vector<2x32xbf16>
    %cst_64 = arith.constant dense<0.000000e+00> : vector<2x96xf32>
    %164 = tpu.matmul %163, %19, %cst_64 {dimension_numbers = #tpu.dot_dimension_numbers<[1], [0], [0], [1], [0, 0, 1, 1], [], []>} : vector<2x32xbf16>, vector<32x96xbf16>, vector<2x96xf32> -> vector<2x96xf32>
    %165 = vector.broadcast %20 : vector<1x96xf32> to vector<2x96xf32>
    %166 = arith.addf %164, %165 : vector<2x96xf32>
    %c4 = arith.constant 4 : index
    %c0_65 = arith.constant 0 : index
    %167 = vector.load %arg15[%c4, %c0_65] : memref<14x96xf32, #tpu.memory_space<vmem>>, vector<2x96xf32>
    %168 = vector.extract_strided_slice %167 {offsets = [0, 0], sizes = [2, 32], strides = [1, 1]} : vector<2x96xf32> to vector<2x32xf32>
    %169 = vector.extract_strided_slice %162 {offsets = [0, 0], sizes = [2, 32], strides = [1, 1]} : vector<2x96xf32> to vector<2x32xf32>
    %170 = arith.addf %168, %169 : vector<2x32xf32>
    %171 = arith.negf %170 : vector<2x32xf32>
    %172 = math.exp %171 : vector<2x32xf32>
    %cst_66 = arith.constant 1.000000e+00 : f32
    %173 = vector.broadcast %cst_66 : f32 to vector<2x32xf32>
    %174 = arith.addf %173, %172 : vector<2x32xf32>
    %175 = arith.divf %173, %174 : vector<2x32xf32>
    %176 = vector.extract_strided_slice %167 {offsets = [0, 32], sizes = [2, 32], strides = [1, 1]} : vector<2x96xf32> to vector<2x32xf32>
    %177 = vector.extract_strided_slice %162 {offsets = [0, 32], sizes = [2, 32], strides = [1, 1]} : vector<2x96xf32> to vector<2x32xf32>
    %178 = arith.addf %176, %177 : vector<2x32xf32>
    %179 = arith.negf %178 : vector<2x32xf32>
    %180 = math.exp %179 : vector<2x32xf32>
    %cst_67 = arith.constant 1.000000e+00 : f32
    %181 = vector.broadcast %cst_67 : f32 to vector<2x32xf32>
    %182 = arith.addf %181, %180 : vector<2x32xf32>
    %183 = arith.divf %181, %182 : vector<2x32xf32>
    %184 = vector.extract_strided_slice %167 {offsets = [0, 64], sizes = [2, 32], strides = [1, 1]} : vector<2x96xf32> to vector<2x32xf32>
    %185 = vector.extract_strided_slice %162 {offsets = [0, 64], sizes = [2, 32], strides = [1, 1]} : vector<2x96xf32> to vector<2x32xf32>
    %186 = arith.mulf %175, %185 : vector<2x32xf32>
    %187 = arith.addf %184, %186 : vector<2x32xf32>
    %188 = math.tanh %187 : vector<2x32xf32>
    %cst_68 = arith.constant 1.000000e+00 : f32
    %189 = vector.broadcast %cst_68 : f32 to vector<2x32xf32>
    %190 = arith.subf %189, %183 : vector<2x32xf32>
    %191 = arith.mulf %190, %188 : vector<2x32xf32>
    %192 = arith.mulf %183, %125 : vector<2x32xf32>
    %193 = arith.addf %191, %192 : vector<2x32xf32>
    %c4_69 = arith.constant 4 : index
    %c0_70 = arith.constant 0 : index
    %194 = vector.load %arg16[%c4_69, %c0_70] : memref<14x96xf32, #tpu.memory_space<vmem>>, vector<2x96xf32>
    %195 = vector.extract_strided_slice %194 {offsets = [0, 0], sizes = [2, 32], strides = [1, 1]} : vector<2x96xf32> to vector<2x32xf32>
    %196 = vector.extract_strided_slice %166 {offsets = [0, 0], sizes = [2, 32], strides = [1, 1]} : vector<2x96xf32> to vector<2x32xf32>
    %197 = arith.addf %195, %196 : vector<2x32xf32>
    %198 = arith.negf %197 : vector<2x32xf32>
    %199 = math.exp %198 : vector<2x32xf32>
    %cst_71 = arith.constant 1.000000e+00 : f32
    %200 = vector.broadcast %cst_71 : f32 to vector<2x32xf32>
    %201 = arith.addf %200, %199 : vector<2x32xf32>
    %202 = arith.divf %200, %201 : vector<2x32xf32>
    %203 = vector.extract_strided_slice %194 {offsets = [0, 32], sizes = [2, 32], strides = [1, 1]} : vector<2x96xf32> to vector<2x32xf32>
    %204 = vector.extract_strided_slice %166 {offsets = [0, 32], sizes = [2, 32], strides = [1, 1]} : vector<2x96xf32> to vector<2x32xf32>
    %205 = arith.addf %203, %204 : vector<2x32xf32>
    %206 = arith.negf %205 : vector<2x32xf32>
    %207 = math.exp %206 : vector<2x32xf32>
    %cst_72 = arith.constant 1.000000e+00 : f32
    %208 = vector.broadcast %cst_72 : f32 to vector<2x32xf32>
    %209 = arith.addf %208, %207 : vector<2x32xf32>
    %210 = arith.divf %208, %209 : vector<2x32xf32>
    %211 = vector.extract_strided_slice %194 {offsets = [0, 64], sizes = [2, 32], strides = [1, 1]} : vector<2x96xf32> to vector<2x32xf32>
    %212 = vector.extract_strided_slice %166 {offsets = [0, 64], sizes = [2, 32], strides = [1, 1]} : vector<2x96xf32> to vector<2x32xf32>
    %213 = arith.mulf %202, %212 : vector<2x32xf32>
    %214 = arith.addf %211, %213 : vector<2x32xf32>
    %215 = math.tanh %214 : vector<2x32xf32>
    %cst_73 = arith.constant 1.000000e+00 : f32
    %216 = vector.broadcast %cst_73 : f32 to vector<2x32xf32>
    %217 = arith.subf %216, %210 : vector<2x32xf32>
    %218 = arith.mulf %217, %215 : vector<2x32xf32>
    %219 = arith.mulf %210, %152 : vector<2x32xf32>
    %220 = arith.addf %218, %219 : vector<2x32xf32>
    %c2_74 = arith.constant 2 : index
    %c0_75 = arith.constant 0 : index
    %c0_76 = arith.constant 0 : index
    %221 = vector.load %arg11[%c2_74, %c0_75, %c0_76] : memref<7x2x32xf32, #tpu.memory_space<vmem>>, vector<1x2x32xf32>
    %222 = vector.shape_cast %221 : vector<1x2x32xf32> to vector<2x32xf32>
    %223 = vector.shape_cast %193 : vector<2x32xf32> to vector<1x2x32xf32>
    tpu.vector_store %arg11[%c2_74, %c0_75, %c0_76], %223 {strides = array<i32>} : memref<7x2x32xf32, #tpu.memory_space<vmem>>, vector<1x2x32xf32>,
    %c2_77 = arith.constant 2 : index
    %c0_78 = arith.constant 0 : index
    %c0_79 = arith.constant 0 : index
    %224 = vector.load %arg12[%c2_77, %c0_78, %c0_79] : memref<7x2x32xf32, #tpu.memory_space<vmem>>, vector<1x2x32xf32>
    %225 = vector.shape_cast %224 : vector<1x2x32xf32> to vector<2x32xf32>
    %226 = vector.shape_cast %220 : vector<2x32xf32> to vector<1x2x32xf32>
    tpu.vector_store %arg12[%c2_77, %c0_78, %c0_79], %226 {strides = array<i32>} : memref<7x2x32xf32, #tpu.memory_space<vmem>>, vector<1x2x32xf32>,
    %227 = arith.truncf %193 : vector<2x32xf32> to vector<2x32xbf16>
    %cst_80 = arith.constant dense<0.000000e+00> : vector<2x96xf32>
    %228 = tpu.matmul %227, %17, %cst_80 {dimension_numbers = #tpu.dot_dimension_numbers<[1], [0], [0], [1], [0, 0, 1, 1], [], []>} : vector<2x32xbf16>, vector<32x96xbf16>, vector<2x96xf32> -> vector<2x96xf32>
    %229 = vector.broadcast %18 : vector<1x96xf32> to vector<2x96xf32>
    %230 = arith.addf %228, %229 : vector<2x96xf32>
    %231 = arith.truncf %220 : vector<2x32xf32> to vector<2x32xbf16>
    %cst_81 = arith.constant dense<0.000000e+00> : vector<2x96xf32>
    %232 = tpu.matmul %231, %19, %cst_81 {dimension_numbers = #tpu.dot_dimension_numbers<[1], [0], [0], [1], [0, 0, 1, 1], [], []>} : vector<2x32xbf16>, vector<32x96xbf16>, vector<2x96xf32> -> vector<2x96xf32>
    %233 = vector.broadcast %20 : vector<1x96xf32> to vector<2x96xf32>
    %234 = arith.addf %232, %233 : vector<2x96xf32>
    %c6 = arith.constant 6 : index
    %c0_82 = arith.constant 0 : index
    %235 = vector.load %arg15[%c6, %c0_82] : memref<14x96xf32, #tpu.memory_space<vmem>>, vector<2x96xf32>
    %236 = vector.extract_strided_slice %235 {offsets = [0, 0], sizes = [2, 32], strides = [1, 1]} : vector<2x96xf32> to vector<2x32xf32>
    %237 = vector.extract_strided_slice %230 {offsets = [0, 0], sizes = [2, 32], strides = [1, 1]} : vector<2x96xf32> to vector<2x32xf32>
    %238 = arith.addf %236, %237 : vector<2x32xf32>
    %239 = arith.negf %238 : vector<2x32xf32>
    %240 = math.exp %239 : vector<2x32xf32>
    %cst_83 = arith.constant 1.000000e+00 : f32
    %241 = vector.broadcast %cst_83 : f32 to vector<2x32xf32>
    %242 = arith.addf %241, %240 : vector<2x32xf32>
    %243 = arith.divf %241, %242 : vector<2x32xf32>
    %244 = vector.extract_strided_slice %235 {offsets = [0, 32], sizes = [2, 32], strides = [1, 1]} : vector<2x96xf32> to vector<2x32xf32>
    %245 = vector.extract_strided_slice %230 {offsets = [0, 32], sizes = [2, 32], strides = [1, 1]} : vector<2x96xf32> to vector<2x32xf32>
    %246 = arith.addf %244, %245 : vector<2x32xf32>
    %247 = arith.negf %246 : vector<2x32xf32>
    %248 = math.exp %247 : vector<2x32xf32>
    %cst_84 = arith.constant 1.000000e+00 : f32
    %249 = vector.broadcast %cst_84 : f32 to vector<2x32xf32>
    %250 = arith.addf %249, %248 : vector<2x32xf32>
    %251 = arith.divf %249, %250 : vector<2x32xf32>
    %252 = vector.extract_strided_slice %235 {offsets = [0, 64], sizes = [2, 32], strides = [1, 1]} : vector<2x96xf32> to vector<2x32xf32>
    %253 = vector.extract_strided_slice %230 {offsets = [0, 64], sizes = [2, 32], strides = [1, 1]} : vector<2x96xf32> to vector<2x32xf32>
    %254 = arith.mulf %243, %253 : vector<2x32xf32>
    %255 = arith.addf %252, %254 : vector<2x32xf32>
    %256 = math.tanh %255 : vector<2x32xf32>
    %cst_85 = arith.constant 1.000000e+00 : f32
    %257 = vector.broadcast %cst_85 : f32 to vector<2x32xf32>
    %258 = arith.subf %257, %251 : vector<2x32xf32>
    %259 = arith.mulf %258, %256 : vector<2x32xf32>
    %260 = arith.mulf %251, %193 : vector<2x32xf32>
    %261 = arith.addf %259, %260 : vector<2x32xf32>
    %c6_86 = arith.constant 6 : index
    %c0_87 = arith.constant 0 : index
    %262 = vector.load %arg16[%c6_86, %c0_87] : memref<14x96xf32, #tpu.memory_space<vmem>>, vector<2x96xf32>
    %263 = vector.extract_strided_slice %262 {offsets = [0, 0], sizes = [2, 32], strides = [1, 1]} : vector<2x96xf32> to vector<2x32xf32>
    %264 = vector.extract_strided_slice %234 {offsets = [0, 0], sizes = [2, 32], strides = [1, 1]} : vector<2x96xf32> to vector<2x32xf32>
    %265 = arith.addf %263, %264 : vector<2x32xf32>
    %266 = arith.negf %265 : vector<2x32xf32>
    %267 = math.exp %266 : vector<2x32xf32>
    %cst_88 = arith.constant 1.000000e+00 : f32
    %268 = vector.broadcast %cst_88 : f32 to vector<2x32xf32>
    %269 = arith.addf %268, %267 : vector<2x32xf32>
    %270 = arith.divf %268, %269 : vector<2x32xf32>
    %271 = vector.extract_strided_slice %262 {offsets = [0, 32], sizes = [2, 32], strides = [1, 1]} : vector<2x96xf32> to vector<2x32xf32>
    %272 = vector.extract_strided_slice %234 {offsets = [0, 32], sizes = [2, 32], strides = [1, 1]} : vector<2x96xf32> to vector<2x32xf32>
    %273 = arith.addf %271, %272 : vector<2x32xf32>
    %274 = arith.negf %273 : vector<2x32xf32>
    %275 = math.exp %274 : vector<2x32xf32>
    %cst_89 = arith.constant 1.000000e+00 : f32
    %276 = vector.broadcast %cst_89 : f32 to vector<2x32xf32>
    %277 = arith.addf %276, %275 : vector<2x32xf32>
    %278 = arith.divf %276, %277 : vector<2x32xf32>
    %279 = vector.extract_strided_slice %262 {offsets = [0, 64], sizes = [2, 32], strides = [1, 1]} : vector<2x96xf32> to vector<2x32xf32>
    %280 = vector.extract_strided_slice %234 {offsets = [0, 64], sizes = [2, 32], strides = [1, 1]} : vector<2x96xf32> to vector<2x32xf32>
    %281 = arith.mulf %270, %280 : vector<2x32xf32>
    %282 = arith.addf %279, %281 : vector<2x32xf32>
    %283 = math.tanh %282 : vector<2x32xf32>
    %cst_90 = arith.constant 1.000000e+00 : f32
    %284 = vector.broadcast %cst_90 : f32 to vector<2x32xf32>
    %285 = arith.subf %284, %278 : vector<2x32xf32>
    %286 = arith.mulf %285, %283 : vector<2x32xf32>
    %287 = arith.mulf %278, %220 : vector<2x32xf32>
    %288 = arith.addf %286, %287 : vector<2x32xf32>
    %c3 = arith.constant 3 : index
    %c0_91 = arith.constant 0 : index
    %c0_92 = arith.constant 0 : index
    %289 = vector.load %arg11[%c3, %c0_91, %c0_92] : memref<7x2x32xf32, #tpu.memory_space<vmem>>, vector<1x2x32xf32>
    %290 = vector.shape_cast %289 : vector<1x2x32xf32> to vector<2x32xf32>
    %291 = vector.shape_cast %261 : vector<2x32xf32> to vector<1x2x32xf32>
    tpu.vector_store %arg11[%c3, %c0_91, %c0_92], %291 {strides = array<i32>} : memref<7x2x32xf32, #tpu.memory_space<vmem>>, vector<1x2x32xf32>,
    %c3_93 = arith.constant 3 : index
    %c0_94 = arith.constant 0 : index
    %c0_95 = arith.constant 0 : index
    %292 = vector.load %arg12[%c3_93, %c0_94, %c0_95] : memref<7x2x32xf32, #tpu.memory_space<vmem>>, vector<1x2x32xf32>
    %293 = vector.shape_cast %292 : vector<1x2x32xf32> to vector<2x32xf32>
    %294 = vector.shape_cast %288 : vector<2x32xf32> to vector<1x2x32xf32>
    tpu.vector_store %arg12[%c3_93, %c0_94, %c0_95], %294 {strides = array<i32>} : memref<7x2x32xf32, #tpu.memory_space<vmem>>, vector<1x2x32xf32>,
    %295 = arith.truncf %261 : vector<2x32xf32> to vector<2x32xbf16>
    %cst_96 = arith.constant dense<0.000000e+00> : vector<2x96xf32>
    %296 = tpu.matmul %295, %17, %cst_96 {dimension_numbers = #tpu.dot_dimension_numbers<[1], [0], [0], [1], [0, 0, 1, 1], [], []>} : vector<2x32xbf16>, vector<32x96xbf16>, vector<2x96xf32> -> vector<2x96xf32>
    %297 = vector.broadcast %18 : vector<1x96xf32> to vector<2x96xf32>
    %298 = arith.addf %296, %297 : vector<2x96xf32>
    %299 = arith.truncf %288 : vector<2x32xf32> to vector<2x32xbf16>
    %cst_97 = arith.constant dense<0.000000e+00> : vector<2x96xf32>
    %300 = tpu.matmul %299, %19, %cst_97 {dimension_numbers = #tpu.dot_dimension_numbers<[1], [0], [0], [1], [0, 0, 1, 1], [], []>} : vector<2x32xbf16>, vector<32x96xbf16>, vector<2x96xf32> -> vector<2x96xf32>
    %301 = vector.broadcast %20 : vector<1x96xf32> to vector<2x96xf32>
    %302 = arith.addf %300, %301 : vector<2x96xf32>
    %c8 = arith.constant 8 : index
    %c0_98 = arith.constant 0 : index
    %303 = vector.load %arg15[%c8, %c0_98] : memref<14x96xf32, #tpu.memory_space<vmem>>, vector<2x96xf32>
    %304 = vector.extract_strided_slice %303 {offsets = [0, 0], sizes = [2, 32], strides = [1, 1]} : vector<2x96xf32> to vector<2x32xf32>
    %305 = vector.extract_strided_slice %298 {offsets = [0, 0], sizes = [2, 32], strides = [1, 1]} : vector<2x96xf32> to vector<2x32xf32>
    %306 = arith.addf %304, %305 : vector<2x32xf32>
    %307 = arith.negf %306 : vector<2x32xf32>
    %308 = math.exp %307 : vector<2x32xf32>
    %cst_99 = arith.constant 1.000000e+00 : f32
    %309 = vector.broadcast %cst_99 : f32 to vector<2x32xf32>
    %310 = arith.addf %309, %308 : vector<2x32xf32>
    %311 = arith.divf %309, %310 : vector<2x32xf32>
    %312 = vector.extract_strided_slice %303 {offsets = [0, 32], sizes = [2, 32], strides = [1, 1]} : vector<2x96xf32> to vector<2x32xf32>
    %313 = vector.extract_strided_slice %298 {offsets = [0, 32], sizes = [2, 32], strides = [1, 1]} : vector<2x96xf32> to vector<2x32xf32>
    %314 = arith.addf %312, %313 : vector<2x32xf32>
    %315 = arith.negf %314 : vector<2x32xf32>
    %316 = math.exp %315 : vector<2x32xf32>
    %cst_100 = arith.constant 1.000000e+00 : f32
    %317 = vector.broadcast %cst_100 : f32 to vector<2x32xf32>
    %318 = arith.addf %317, %316 : vector<2x32xf32>
    %319 = arith.divf %317, %318 : vector<2x32xf32>
    %320 = vector.extract_strided_slice %303 {offsets = [0, 64], sizes = [2, 32], strides = [1, 1]} : vector<2x96xf32> to vector<2x32xf32>
    %321 = vector.extract_strided_slice %298 {offsets = [0, 64], sizes = [2, 32], strides = [1, 1]} : vector<2x96xf32> to vector<2x32xf32>
    %322 = arith.mulf %311, %321 : vector<2x32xf32>
    %323 = arith.addf %320, %322 : vector<2x32xf32>
    %324 = math.tanh %323 : vector<2x32xf32>
    %cst_101 = arith.constant 1.000000e+00 : f32
    %325 = vector.broadcast %cst_101 : f32 to vector<2x32xf32>
    %326 = arith.subf %325, %319 : vector<2x32xf32>
    %327 = arith.mulf %326, %324 : vector<2x32xf32>
    %328 = arith.mulf %319, %261 : vector<2x32xf32>
    %329 = arith.addf %327, %328 : vector<2x32xf32>
    %c8_102 = arith.constant 8 : index
    %c0_103 = arith.constant 0 : index
    %330 = vector.load %arg16[%c8_102, %c0_103] : memref<14x96xf32, #tpu.memory_space<vmem>>, vector<2x96xf32>
    %331 = vector.extract_strided_slice %330 {offsets = [0, 0], sizes = [2, 32], strides = [1, 1]} : vector<2x96xf32> to vector<2x32xf32>
    %332 = vector.extract_strided_slice %302 {offsets = [0, 0], sizes = [2, 32], strides = [1, 1]} : vector<2x96xf32> to vector<2x32xf32>
    %333 = arith.addf %331, %332 : vector<2x32xf32>
    %334 = arith.negf %333 : vector<2x32xf32>
    %335 = math.exp %334 : vector<2x32xf32>
    %cst_104 = arith.constant 1.000000e+00 : f32
    %336 = vector.broadcast %cst_104 : f32 to vector<2x32xf32>
    %337 = arith.addf %336, %335 : vector<2x32xf32>
    %338 = arith.divf %336, %337 : vector<2x32xf32>
    %339 = vector.extract_strided_slice %330 {offsets = [0, 32], sizes = [2, 32], strides = [1, 1]} : vector<2x96xf32> to vector<2x32xf32>
    %340 = vector.extract_strided_slice %302 {offsets = [0, 32], sizes = [2, 32], strides = [1, 1]} : vector<2x96xf32> to vector<2x32xf32>
    %341 = arith.addf %339, %340 : vector<2x32xf32>
    %342 = arith.negf %341 : vector<2x32xf32>
    %343 = math.exp %342 : vector<2x32xf32>
    %cst_105 = arith.constant 1.000000e+00 : f32
    %344 = vector.broadcast %cst_105 : f32 to vector<2x32xf32>
    %345 = arith.addf %344, %343 : vector<2x32xf32>
    %346 = arith.divf %344, %345 : vector<2x32xf32>
    %347 = vector.extract_strided_slice %330 {offsets = [0, 64], sizes = [2, 32], strides = [1, 1]} : vector<2x96xf32> to vector<2x32xf32>
    %348 = vector.extract_strided_slice %302 {offsets = [0, 64], sizes = [2, 32], strides = [1, 1]} : vector<2x96xf32> to vector<2x32xf32>
    %349 = arith.mulf %338, %348 : vector<2x32xf32>
    %350 = arith.addf %347, %349 : vector<2x32xf32>
    %351 = math.tanh %350 : vector<2x32xf32>
    %cst_106 = arith.constant 1.000000e+00 : f32
    %352 = vector.broadcast %cst_106 : f32 to vector<2x32xf32>
    %353 = arith.subf %352, %346 : vector<2x32xf32>
    %354 = arith.mulf %353, %351 : vector<2x32xf32>
    %355 = arith.mulf %346, %288 : vector<2x32xf32>
    %356 = arith.addf %354, %355 : vector<2x32xf32>
    %c4_107 = arith.constant 4 : index
    %c0_108 = arith.constant 0 : index
    %c0_109 = arith.constant 0 : index
    %357 = vector.load %arg11[%c4_107, %c0_108, %c0_109] : memref<7x2x32xf32, #tpu.memory_space<vmem>>, vector<1x2x32xf32>
    %358 = vector.shape_cast %357 : vector<1x2x32xf32> to vector<2x32xf32>
    %359 = vector.shape_cast %329 : vector<2x32xf32> to vector<1x2x32xf32>
    tpu.vector_store %arg11[%c4_107, %c0_108, %c0_109], %359 {strides = array<i32>} : memref<7x2x32xf32, #tpu.memory_space<vmem>>, vector<1x2x32xf32>,
    %c4_110 = arith.constant 4 : index
    %c0_111 = arith.constant 0 : index
    %c0_112 = arith.constant 0 : index
    %360 = vector.load %arg12[%c4_110, %c0_111, %c0_112] : memref<7x2x32xf32, #tpu.memory_space<vmem>>, vector<1x2x32xf32>
    %361 = vector.shape_cast %360 : vector<1x2x32xf32> to vector<2x32xf32>
    %362 = vector.shape_cast %356 : vector<2x32xf32> to vector<1x2x32xf32>
    tpu.vector_store %arg12[%c4_110, %c0_111, %c0_112], %362 {strides = array<i32>} : memref<7x2x32xf32, #tpu.memory_space<vmem>>, vector<1x2x32xf32>,
    %363 = arith.truncf %329 : vector<2x32xf32> to vector<2x32xbf16>
    %cst_113 = arith.constant dense<0.000000e+00> : vector<2x96xf32>
    %364 = tpu.matmul %363, %17, %cst_113 {dimension_numbers = #tpu.dot_dimension_numbers<[1], [0], [0], [1], [0, 0, 1, 1], [], []>} : vector<2x32xbf16>, vector<32x96xbf16>, vector<2x96xf32> -> vector<2x96xf32>
    %365 = vector.broadcast %18 : vector<1x96xf32> to vector<2x96xf32>
    %366 = arith.addf %364, %365 : vector<2x96xf32>
    %367 = arith.truncf %356 : vector<2x32xf32> to vector<2x32xbf16>
    %cst_114 = arith.constant dense<0.000000e+00> : vector<2x96xf32>
    %368 = tpu.matmul %367, %19, %cst_114 {dimension_numbers = #tpu.dot_dimension_numbers<[1], [0], [0], [1], [0, 0, 1, 1], [], []>} : vector<2x32xbf16>, vector<32x96xbf16>, vector<2x96xf32> -> vector<2x96xf32>
    %369 = vector.broadcast %20 : vector<1x96xf32> to vector<2x96xf32>
    %370 = arith.addf %368, %369 : vector<2x96xf32>
    %c10 = arith.constant 10 : index
    %c0_115 = arith.constant 0 : index
    %371 = vector.load %arg15[%c10, %c0_115] : memref<14x96xf32, #tpu.memory_space<vmem>>, vector<2x96xf32>
    %372 = vector.extract_strided_slice %371 {offsets = [0, 0], sizes = [2, 32], strides = [1, 1]} : vector<2x96xf32> to vector<2x32xf32>
    %373 = vector.extract_strided_slice %366 {offsets = [0, 0], sizes = [2, 32], strides = [1, 1]} : vector<2x96xf32> to vector<2x32xf32>
    %374 = arith.addf %372, %373 : vector<2x32xf32>
    %375 = arith.negf %374 : vector<2x32xf32>
    %376 = math.exp %375 : vector<2x32xf32>
    %cst_116 = arith.constant 1.000000e+00 : f32
    %377 = vector.broadcast %cst_116 : f32 to vector<2x32xf32>
    %378 = arith.addf %377, %376 : vector<2x32xf32>
    %379 = arith.divf %377, %378 : vector<2x32xf32>
    %380 = vector.extract_strided_slice %371 {offsets = [0, 32], sizes = [2, 32], strides = [1, 1]} : vector<2x96xf32> to vector<2x32xf32>
    %381 = vector.extract_strided_slice %366 {offsets = [0, 32], sizes = [2, 32], strides = [1, 1]} : vector<2x96xf32> to vector<2x32xf32>
    %382 = arith.addf %380, %381 : vector<2x32xf32>
    %383 = arith.negf %382 : vector<2x32xf32>
    %384 = math.exp %383 : vector<2x32xf32>
    %cst_117 = arith.constant 1.000000e+00 : f32
    %385 = vector.broadcast %cst_117 : f32 to vector<2x32xf32>
    %386 = arith.addf %385, %384 : vector<2x32xf32>
    %387 = arith.divf %385, %386 : vector<2x32xf32>
    %388 = vector.extract_strided_slice %371 {offsets = [0, 64], sizes = [2, 32], strides = [1, 1]} : vector<2x96xf32> to vector<2x32xf32>
    %389 = vector.extract_strided_slice %366 {offsets = [0, 64], sizes = [2, 32], strides = [1, 1]} : vector<2x96xf32> to vector<2x32xf32>
    %390 = arith.mulf %379, %389 : vector<2x32xf32>
    %391 = arith.addf %388, %390 : vector<2x32xf32>
    %392 = math.tanh %391 : vector<2x32xf32>
    %cst_118 = arith.constant 1.000000e+00 : f32
    %393 = vector.broadcast %cst_118 : f32 to vector<2x32xf32>
    %394 = arith.subf %393, %387 : vector<2x32xf32>
    %395 = arith.mulf %394, %392 : vector<2x32xf32>
    %396 = arith.mulf %387, %329 : vector<2x32xf32>
    %397 = arith.addf %395, %396 : vector<2x32xf32>
    %c10_119 = arith.constant 10 : index
    %c0_120 = arith.constant 0 : index
    %398 = vector.load %arg16[%c10_119, %c0_120] : memref<14x96xf32, #tpu.memory_space<vmem>>, vector<2x96xf32>
    %399 = vector.extract_strided_slice %398 {offsets = [0, 0], sizes = [2, 32], strides = [1, 1]} : vector<2x96xf32> to vector<2x32xf32>
    %400 = vector.extract_strided_slice %370 {offsets = [0, 0], sizes = [2, 32], strides = [1, 1]} : vector<2x96xf32> to vector<2x32xf32>
    %401 = arith.addf %399, %400 : vector<2x32xf32>
    %402 = arith.negf %401 : vector<2x32xf32>
    %403 = math.exp %402 : vector<2x32xf32>
    %cst_121 = arith.constant 1.000000e+00 : f32
    %404 = vector.broadcast %cst_121 : f32 to vector<2x32xf32>
    %405 = arith.addf %404, %403 : vector<2x32xf32>
    %406 = arith.divf %404, %405 : vector<2x32xf32>
    %407 = vector.extract_strided_slice %398 {offsets = [0, 32], sizes = [2, 32], strides = [1, 1]} : vector<2x96xf32> to vector<2x32xf32>
    %408 = vector.extract_strided_slice %370 {offsets = [0, 32], sizes = [2, 32], strides = [1, 1]} : vector<2x96xf32> to vector<2x32xf32>
    %409 = arith.addf %407, %408 : vector<2x32xf32>
    %410 = arith.negf %409 : vector<2x32xf32>
    %411 = math.exp %410 : vector<2x32xf32>
    %cst_122 = arith.constant 1.000000e+00 : f32
    %412 = vector.broadcast %cst_122 : f32 to vector<2x32xf32>
    %413 = arith.addf %412, %411 : vector<2x32xf32>
    %414 = arith.divf %412, %413 : vector<2x32xf32>
    %415 = vector.extract_strided_slice %398 {offsets = [0, 64], sizes = [2, 32], strides = [1, 1]} : vector<2x96xf32> to vector<2x32xf32>
    %416 = vector.extract_strided_slice %370 {offsets = [0, 64], sizes = [2, 32], strides = [1, 1]} : vector<2x96xf32> to vector<2x32xf32>
    %417 = arith.mulf %406, %416 : vector<2x32xf32>
    %418 = arith.addf %415, %417 : vector<2x32xf32>
    %419 = math.tanh %418 : vector<2x32xf32>
    %cst_123 = arith.constant 1.000000e+00 : f32
    %420 = vector.broadcast %cst_123 : f32 to vector<2x32xf32>
    %421 = arith.subf %420, %414 : vector<2x32xf32>
    %422 = arith.mulf %421, %419 : vector<2x32xf32>
    %423 = arith.mulf %414, %356 : vector<2x32xf32>
    %424 = arith.addf %422, %423 : vector<2x32xf32>
    %c5 = arith.constant 5 : index
    %c0_124 = arith.constant 0 : index
    %c0_125 = arith.constant 0 : index
    %425 = vector.load %arg11[%c5, %c0_124, %c0_125] : memref<7x2x32xf32, #tpu.memory_space<vmem>>, vector<1x2x32xf32>
    %426 = vector.shape_cast %425 : vector<1x2x32xf32> to vector<2x32xf32>
    %427 = vector.shape_cast %397 : vector<2x32xf32> to vector<1x2x32xf32>
    tpu.vector_store %arg11[%c5, %c0_124, %c0_125], %427 {strides = array<i32>} : memref<7x2x32xf32, #tpu.memory_space<vmem>>, vector<1x2x32xf32>,
    %c5_126 = arith.constant 5 : index
    %c0_127 = arith.constant 0 : index
    %c0_128 = arith.constant 0 : index
    %428 = vector.load %arg12[%c5_126, %c0_127, %c0_128] : memref<7x2x32xf32, #tpu.memory_space<vmem>>, vector<1x2x32xf32>
    %429 = vector.shape_cast %428 : vector<1x2x32xf32> to vector<2x32xf32>
    %430 = vector.shape_cast %424 : vector<2x32xf32> to vector<1x2x32xf32>
    tpu.vector_store %arg12[%c5_126, %c0_127, %c0_128], %430 {strides = array<i32>} : memref<7x2x32xf32, #tpu.memory_space<vmem>>, vector<1x2x32xf32>,
    %431 = arith.truncf %397 : vector<2x32xf32> to vector<2x32xbf16>
    %cst_129 = arith.constant dense<0.000000e+00> : vector<2x96xf32>
    %432 = tpu.matmul %431, %17, %cst_129 {dimension_numbers = #tpu.dot_dimension_numbers<[1], [0], [0], [1], [0, 0, 1, 1], [], []>} : vector<2x32xbf16>, vector<32x96xbf16>, vector<2x96xf32> -> vector<2x96xf32>
    %433 = vector.broadcast %18 : vector<1x96xf32> to vector<2x96xf32>
    %434 = arith.addf %432, %433 : vector<2x96xf32>
    %435 = arith.truncf %424 : vector<2x32xf32> to vector<2x32xbf16>
    %cst_130 = arith.constant dense<0.000000e+00> : vector<2x96xf32>
    %436 = tpu.matmul %435, %19, %cst_130 {dimension_numbers = #tpu.dot_dimension_numbers<[1], [0], [0], [1], [0, 0, 1, 1], [], []>} : vector<2x32xbf16>, vector<32x96xbf16>, vector<2x96xf32> -> vector<2x96xf32>
    %437 = vector.broadcast %20 : vector<1x96xf32> to vector<2x96xf32>
    %438 = arith.addf %436, %437 : vector<2x96xf32>
    %c12 = arith.constant 12 : index
    %c0_131 = arith.constant 0 : index
    %439 = vector.load %arg15[%c12, %c0_131] : memref<14x96xf32, #tpu.memory_space<vmem>>, vector<2x96xf32>
    %440 = vector.extract_strided_slice %439 {offsets = [0, 0], sizes = [2, 32], strides = [1, 1]} : vector<2x96xf32> to vector<2x32xf32>
    %441 = vector.extract_strided_slice %434 {offsets = [0, 0], sizes = [2, 32], strides = [1, 1]} : vector<2x96xf32> to vector<2x32xf32>
    %442 = arith.addf %440, %441 : vector<2x32xf32>
    %443 = arith.negf %442 : vector<2x32xf32>
    %444 = math.exp %443 : vector<2x32xf32>
    %cst_132 = arith.constant 1.000000e+00 : f32
    %445 = vector.broadcast %cst_132 : f32 to vector<2x32xf32>
    %446 = arith.addf %445, %444 : vector<2x32xf32>
    %447 = arith.divf %445, %446 : vector<2x32xf32>
    %448 = vector.extract_strided_slice %439 {offsets = [0, 32], sizes = [2, 32], strides = [1, 1]} : vector<2x96xf32> to vector<2x32xf32>
    %449 = vector.extract_strided_slice %434 {offsets = [0, 32], sizes = [2, 32], strides = [1, 1]} : vector<2x96xf32> to vector<2x32xf32>
    %450 = arith.addf %448, %449 : vector<2x32xf32>
    %451 = arith.negf %450 : vector<2x32xf32>
    %452 = math.exp %451 : vector<2x32xf32>
    %cst_133 = arith.constant 1.000000e+00 : f32
    %453 = vector.broadcast %cst_133 : f32 to vector<2x32xf32>
    %454 = arith.addf %453, %452 : vector<2x32xf32>
    %455 = arith.divf %453, %454 : vector<2x32xf32>
    %456 = vector.extract_strided_slice %439 {offsets = [0, 64], sizes = [2, 32], strides = [1, 1]} : vector<2x96xf32> to vector<2x32xf32>
    %457 = vector.extract_strided_slice %434 {offsets = [0, 64], sizes = [2, 32], strides = [1, 1]} : vector<2x96xf32> to vector<2x32xf32>
    %458 = arith.mulf %447, %457 : vector<2x32xf32>
    %459 = arith.addf %456, %458 : vector<2x32xf32>
    %460 = math.tanh %459 : vector<2x32xf32>
    %cst_134 = arith.constant 1.000000e+00 : f32
    %461 = vector.broadcast %cst_134 : f32 to vector<2x32xf32>
    %462 = arith.subf %461, %455 : vector<2x32xf32>
    %463 = arith.mulf %462, %460 : vector<2x32xf32>
    %464 = arith.mulf %455, %397 : vector<2x32xf32>
    %465 = arith.addf %463, %464 : vector<2x32xf32>
    %c12_135 = arith.constant 12 : index
    %c0_136 = arith.constant 0 : index
    %466 = vector.load %arg16[%c12_135, %c0_136] : memref<14x96xf32, #tpu.memory_space<vmem>>, vector<2x96xf32>
    %467 = vector.extract_strided_slice %466 {offsets = [0, 0], sizes = [2, 32], strides = [1, 1]} : vector<2x96xf32> to vector<2x32xf32>
    %468 = vector.extract_strided_slice %438 {offsets = [0, 0], sizes = [2, 32], strides = [1, 1]} : vector<2x96xf32> to vector<2x32xf32>
    %469 = arith.addf %467, %468 : vector<2x32xf32>
    %470 = arith.negf %469 : vector<2x32xf32>
    %471 = math.exp %470 : vector<2x32xf32>
    %cst_137 = arith.constant 1.000000e+00 : f32
    %472 = vector.broadcast %cst_137 : f32 to vector<2x32xf32>
    %473 = arith.addf %472, %471 : vector<2x32xf32>
    %474 = arith.divf %472, %473 : vector<2x32xf32>
    %475 = vector.extract_strided_slice %466 {offsets = [0, 32], sizes = [2, 32], strides = [1, 1]} : vector<2x96xf32> to vector<2x32xf32>
    %476 = vector.extract_strided_slice %438 {offsets = [0, 32], sizes = [2, 32], strides = [1, 1]} : vector<2x96xf32> to vector<2x32xf32>
    %477 = arith.addf %475, %476 : vector<2x32xf32>
    %478 = arith.negf %477 : vector<2x32xf32>
    %479 = math.exp %478 : vector<2x32xf32>
    %cst_138 = arith.constant 1.000000e+00 : f32
    %480 = vector.broadcast %cst_138 : f32 to vector<2x32xf32>
    %481 = arith.addf %480, %479 : vector<2x32xf32>
    %482 = arith.divf %480, %481 : vector<2x32xf32>
    %483 = vector.extract_strided_slice %466 {offsets = [0, 64], sizes = [2, 32], strides = [1, 1]} : vector<2x96xf32> to vector<2x32xf32>
    %484 = vector.extract_strided_slice %438 {offsets = [0, 64], sizes = [2, 32], strides = [1, 1]} : vector<2x96xf32> to vector<2x32xf32>
    %485 = arith.mulf %474, %484 : vector<2x32xf32>
    %486 = arith.addf %483, %485 : vector<2x32xf32>
    %487 = math.tanh %486 : vector<2x32xf32>
    %cst_139 = arith.constant 1.000000e+00 : f32
    %488 = vector.broadcast %cst_139 : f32 to vector<2x32xf32>
    %489 = arith.subf %488, %482 : vector<2x32xf32>
    %490 = arith.mulf %489, %487 : vector<2x32xf32>
    %491 = arith.mulf %482, %424 : vector<2x32xf32>
    %492 = arith.addf %490, %491 : vector<2x32xf32>
    %c6_140 = arith.constant 6 : index
    %c0_141 = arith.constant 0 : index
    %c0_142 = arith.constant 0 : index
    %493 = vector.load %arg11[%c6_140, %c0_141, %c0_142] : memref<7x2x32xf32, #tpu.memory_space<vmem>>, vector<1x2x32xf32>
    %494 = vector.shape_cast %493 : vector<1x2x32xf32> to vector<2x32xf32>
    %495 = vector.shape_cast %465 : vector<2x32xf32> to vector<1x2x32xf32>
    tpu.vector_store %arg11[%c6_140, %c0_141, %c0_142], %495 {strides = array<i32>} : memref<7x2x32xf32, #tpu.memory_space<vmem>>, vector<1x2x32xf32>,
    %c6_143 = arith.constant 6 : index
    %c0_144 = arith.constant 0 : index
    %c0_145 = arith.constant 0 : index
    %496 = vector.load %arg12[%c6_143, %c0_144, %c0_145] : memref<7x2x32xf32, #tpu.memory_space<vmem>>, vector<1x2x32xf32>
    %497 = vector.shape_cast %496 : vector<1x2x32xf32> to vector<2x32xf32>
    %498 = vector.shape_cast %492 : vector<2x32xf32> to vector<1x2x32xf32>
    tpu.vector_store %arg12[%c6_143, %c0_144, %c0_145], %498 {strides = array<i32>} : memref<7x2x32xf32, #tpu.memory_space<vmem>>, vector<1x2x32xf32>,
    %c0_146 = arith.constant 0 : index
    %c0_147 = arith.constant 0 : index
    %499 = vector.load %arg13[%c0_146, %c0_147] : memref<2x32xf32, #tpu.memory_space<vmem>>, vector<2x32xf32>
    tpu.vector_store %arg13[%c0_146, %c0_147], %465 {strides = array<i32>} : memref<2x32xf32, #tpu.memory_space<vmem>>, vector<2x32xf32>,
    %c0_148 = arith.constant 0 : index
    %c0_149 = arith.constant 0 : index
    %500 = vector.load %arg14[%c0_148, %c0_149] : memref<2x32xf32, #tpu.memory_space<vmem>>, vector<2x32xf32>
    tpu.vector_store %arg14[%c0_148, %c0_149], %492 {strides = array<i32>} : memref<2x32xf32, #tpu.memory_space<vmem>>, vector<2x32xf32>,
    return
  }
  func.func @transform_0(%arg0: i32) -> (i32, i32) {
    %c0_i32 = arith.constant 0 : i32
    %c0_i32_0 = arith.constant 0 : i32
    return %arg0, %c0_i32 : i32, i32
  }
  func.func @transform_1(%arg0: i32) -> (i32, i32) {
    %c0_i32 = arith.constant 0 : i32
    %c0_i32_0 = arith.constant 0 : i32
    return %arg0, %c0_i32 : i32, i32
  }
  func.func @transform_2(%arg0: i32) -> (i32, i32) {
    %c0_i32 = arith.constant 0 : i32
    %c0_i32_0 = arith.constant 0 : i32
    %c0_i32_1 = arith.constant 0 : i32
    return %c0_i32, %c0_i32_0 : i32, i32
  }
  func.func @transform_3(%arg0: i32) -> (i32, i32) {
    %c0_i32 = arith.constant 0 : i32
    %c0_i32_0 = arith.constant 0 : i32
    %c0_i32_1 = arith.constant 0 : i32
    return %c0_i32, %c0_i32_0 : i32, i32
  }
  func.func @transform_4(%arg0: i32) -> (i32, i32) {
    %c0_i32 = arith.constant 0 : i32
    %c0_i32_0 = arith.constant 0 : i32
    %c0_i32_1 = arith.constant 0 : i32
    return %c0_i32, %c0_i32_0 : i32, i32
  }
  func.func @transform_5(%arg0: i32) -> (i32, i32) {
    %c0_i32 = arith.constant 0 : i32
    %c0_i32_0 = arith.constant 0 : i32
    %c0_i32_1 = arith.constant 0 : i32
    return %c0_i32, %c0_i32_0 : i32, i32
  }
  func.func @transform_6(%arg0: i32) -> (i32, i32) {
    %c0_i32 = arith.constant 0 : i32
    %c0_i32_0 = arith.constant 0 : i32
    %c0_i32_1 = arith.constant 0 : i32
    return %c0_i32, %c0_i32_0 : i32, i32
  }
  func.func @transform_7(%arg0: i32) -> (i32, i32) {
    %c0_i32 = arith.constant 0 : i32
    %c0_i32_0 = arith.constant 0 : i32
    %c0_i32_1 = arith.constant 0 : i32
    return %c0_i32, %c0_i32_0 : i32, i32
  }
  func.func @transform_8(%arg0: i32) -> (i32, i32) {
    %c0_i32 = arith.constant 0 : i32
    %c0_i32_0 = arith.constant 0 : i32
    %c0_i32_1 = arith.constant 0 : i32
    return %c0_i32, %c0_i32_0 : i32, i32
  }
  func.func @transform_9(%arg0: i32) -> (i32, i32) {
    %c0_i32 = arith.constant 0 : i32
    %c0_i32_0 = arith.constant 0 : i32
    %c0_i32_1 = arith.constant 0 : i32
    return %c0_i32, %c0_i32_0 : i32, i32
  }
  func.func @transform_10(%arg0: i32) -> (i32, i32, i32) {
    %c0_i32 = arith.constant 0 : i32
    %c0_i32_0 = arith.constant 0 : i32
    %c0_i32_1 = arith.constant 0 : i32
    return %arg0, %c0_i32, %c0_i32_0 : i32, i32, i32
  }
  func.func @transform_11(%arg0: i32) -> (i32, i32, i32) {
    %c0_i32 = arith.constant 0 : i32
    %c0_i32_0 = arith.constant 0 : i32
    %c0_i32_1 = arith.constant 0 : i32
    return %arg0, %c0_i32, %c0_i32_0 : i32, i32, i32
  }
}

</mosaic_0001>

<llo_original>
// kernel: tpu_custom_call.1
$region0: #{tpu_custom_call.1}
  #allocation0 [shape = 'u32[]', space=smem, size = 0x4, offset = 0x4, fixed_abs, tag = 'smem constant byte address 0x4 - core index']
  #allocation1 [shape = 'u32[144,128]{1,0:T(1,128)}', space=vmem, size = 0x12000, scoped, tag = 'internal scratch']
  #allocation2 [shape = 'f32[2,32]{1,0:T(2,128)}', space=vmem, size = 0x400, scoped, tag = 'scratch operand']
  #allocation3 [shape = 'f32[2,32]{1,0:T(2,128)}', space=vmem, size = 0x400, scoped, tag = 'scratch operand']
  #allocation4 [shape = 'f32[14,96]{1,0:T(8,128)}', space=vmem, size = 0x2000, scoped, tag = 'scratch operand']
  #allocation5 [shape = 'f32[14,96]{1,0:T(8,128)}', space=vmem, size = 0x2000, scoped, tag = 'scratch operand']
  %s0 = inlined_call_operand.vmem [shape: bf16[14,128], index: 0, kind: input, shape index: {}]
  %s1 = inlined_call_operand.vmem [shape: bf16[14,64], index: 1, kind: input, shape index: {}]
  %s2 = inlined_call_operand.vmem [shape: bf16[128,96], index: 2, kind: input, shape index: {}]
  %s3 = inlined_call_operand.vmem [shape: bf16[32,96], index: 3, kind: input, shape index: {}]
  %s4 = inlined_call_operand.vmem [shape: f32[1,96], index: 4, kind: input, shape index: {}]
  %s5 = inlined_call_operand.vmem [shape: f32[1,96], index: 5, kind: input, shape index: {}]
  %s6 = inlined_call_operand.vmem [shape: bf16[64,96], index: 6, kind: input, shape index: {}]
  %s7 = inlined_call_operand.vmem [shape: bf16[32,96], index: 7, kind: input, shape index: {}]
  %s8 = inlined_call_operand.vmem [shape: f32[1,96], index: 8, kind: input, shape index: {}]
  %s9 = inlined_call_operand.vmem [shape: f32[1,96], index: 9, kind: input, shape index: {}]
  %s10 = inlined_call_operand.hbm [shape: f32[7,2,32], index: 10, kind: output, shape index: {0}]
  %s11 = inlined_call_operand.hbm [shape: f32[7,2,32], index: 11, kind: output, shape index: {1}]
  %12 = xla_tuple %s10, %s11
  %s13 = sld [smem:[#allocation0]]
  $region62: #{tpu_custom_call.1} parent=0
    _
  %s15 = ssub.s32 1, %s13
  %s16 = scalar_select 0, %s15, %s13
  $region1: #{tpu_custom_call.1} parent=0
    #allocation6 [shape = 'u8[7168]{0}', space=vmem, size = 0x1c00, scoped, tag = 'output window, operand 0, single buffered']
    #allocation7 [shape = 's32[1]{0}', space=sflag, size = 0x4, scoped, tag = 'scoped memory for tpu_custom_call.1']
    #allocation8 [shape = 'u8[7168]{0}', space=vmem, size = 0x1c00, scoped, tag = 'output window, operand 1, single buffered']
    #allocation9 [shape = 's32[1]{0}', space=sflag, size = 0x4, scoped, tag = 'scoped memory for tpu_custom_call.1']
    %17 = vsyncpa [#allocation7], 0
    %18 = vsyncpa [#allocation9], 0
    // Predicated region
    $region2: #{tpu_custom_call.1} parent=1 // pred_check
      _
    $region3: #{tpu_custom_call.1} parent=1 // pred_check_branch
      %20 = sbr.rel (0) target = $region5
    $region4: #{tpu_custom_call.1} parent=1 // pred_region
      _
    $region5: #{tpu_custom_call.1} parent=1 // pred_fallthru
      _
    // Predicated region
    $region6: #{tpu_custom_call.1} parent=1 // pred_check
      _
    $region7: #{tpu_custom_call.1} parent=1 // pred_check_branch
      %22 = sbr.rel (0) target = $region9
    $region8: #{tpu_custom_call.1} parent=1 // pred_region
      _
    $region9: #{tpu_custom_call.1} parent=1 // pred_fallthru
      _
    // Predicated region
    $region10: #{tpu_custom_call.1} parent=1 // pred_check
      _
    $region11: #{tpu_custom_call.1} parent=1 // pred_check_branch
      %24 = sbr.rel (0) target = $region13
    $region12: #{tpu_custom_call.1} parent=1 // pred_region
      _
    $region13: #{tpu_custom_call.1} parent=1 // pred_fallthru
      _
    // Predicated region
    $region14: #{tpu_custom_call.1} parent=1 // pred_check
      _
    $region15: #{tpu_custom_call.1} parent=1 // pred_check_branch
      %26 = sbr.rel (0) target = $region17
    $region16: #{tpu_custom_call.1} parent=1 // pred_region
      _
    $region17: #{tpu_custom_call.1} parent=1 // pred_fallthru
      _
    // Predicated region
    $region18: #{tpu_custom_call.1} parent=1 // pred_check
      _
    $region19: #{tpu_custom_call.1} parent=1 // pred_check_branch
      %28 = sbr.rel (0) target = $region21
    $region20: #{tpu_custom_call.1} parent=1 // pred_region
      _
    $region21: #{tpu_custom_call.1} parent=1 // pred_fallthru
      _
    // Predicated region
    $region22: #{tpu_custom_call.1} parent=1 // pred_check
      _
    $region23: #{tpu_custom_call.1} parent=1 // pred_check_branch
      %30 = sbr.rel (0) target = $region25
    $region24: #{tpu_custom_call.1} parent=1 // pred_region
      _
    $region25: #{tpu_custom_call.1} parent=1 // pred_fallthru
      _
    // Predicated region
    $region26: #{tpu_custom_call.1} parent=1 // pred_check
      _
    $region27: #{tpu_custom_call.1} parent=1 // pred_check_branch
      %32 = sbr.rel (0) target = $region29
    $region28: #{tpu_custom_call.1} parent=1 // pred_region
      _
    $region29: #{tpu_custom_call.1} parent=1 // pred_fallthru
      _
    // Predicated region
    $region30: #{tpu_custom_call.1} parent=1 // pred_check
      _
    $region31: #{tpu_custom_call.1} parent=1 // pred_check_branch
      %34 = sbr.rel (0) target = $region33
    $region32: #{tpu_custom_call.1} parent=1 // pred_region
      _
    $region33: #{tpu_custom_call.1} parent=1 // pred_fallthru
      _
    // Predicated region
    $region34: #{tpu_custom_call.1} parent=1 // pred_check
      _
    $region35: #{tpu_custom_call.1} parent=1 // pred_check_branch
      %36 = sbr.rel (0) target = $region37
    $region36: #{tpu_custom_call.1} parent=1 // pred_region
      _
    $region37: #{tpu_custom_call.1} parent=1 // pred_fallthru
      _
    // Predicated region
    $region38: #{tpu_custom_call.1} parent=1 // pred_check
      _
    $region39: #{tpu_custom_call.1} parent=1 // pred_check_branch
      %38 = sbr.rel (0) target = $region41
    $region40: #{tpu_custom_call.1} parent=1 // pred_region
      _
    $region41: #{tpu_custom_call.1} parent=1 // pred_fallthru
      _
    %p40 = scmp.eq.s32.totalorder 0, 0
    // Predicated region
    $region42: #{tpu_custom_call.1} parent=1 // pred_check
      %p41 = pneg %p40
    $region43: #{tpu_custom_call.1} parent=1 // pred_check_branch
      %43 = sbr.rel (%p41) target = $region45
    $region44: #{tpu_custom_call.1} parent=1 // pred_region
      %vm44 = vcmask 254976
      %45 = vst.msk [vmem:[#allocation2] sm:$0x3] %vm44, 0.0
      %46 = vst.msk [vmem:[#allocation3] sm:$0x3] %vm44, 0.0
    $region45: #{tpu_custom_call.1} parent=1 // pred_fallthru
      _
    %v47 = vld [vmem:[%s0] sm:$0xf]
    %v48 = vld [vmem:[%s0 + $0x4] sm:$0x7]
    %v49 = vld [vmem:[%s2] sm:$0xf]
    %v50 = vld [vmem:[%s2 + $0x4] sm:$0xf]
    %v51 = vld [vmem:[%s2 + $0x8] sm:$0xf]
    %v52 = vld [vmem:[%s2 + $0xc] sm:$0xf]
    %v53 = vld [vmem:[%s2 + $0x10] sm:$0xf]
    %v54 = vld [vmem:[%s2 + $0x14] sm:$0xf]
    %v55 = vld [vmem:[%s2 + $0x18] sm:$0xf]
    %v56 = vld [vmem:[%s2 + $0x1c] sm:$0xf]
    %v57 = vld [vmem:[%s2 + $0x20] sm:$0xf]
    %v58 = vld [vmem:[%s2 + $0x24] sm:$0xf]
    %v59 = vld [vmem:[%s2 + $0x28] sm:$0xf]
    %v60 = vld [vmem:[%s2 + $0x2c] sm:$0xf]
    %v61 = vld [vmem:[%s2 + $0x30] sm:$0xf]
    %v62 = vld [vmem:[%s2 + $0x34] sm:$0xf]
    %v63 = vld [vmem:[%s2 + $0x38] sm:$0xf]
    %v64 = vld [vmem:[%s2 + $0x3c] sm:$0xf]
    %v65 = vld [vmem:[%s4] sm:$0x1]
    %v67 = vlaneseq
    %v68 = vshrl.u32 %v67, 7
    %v69 = vsub.s32 0, %v68
    %v70 = vrot.slane %v65, %v69
    %v74 = vunpack.c.l.b16 %v47
    %v75 = vunpack.c.l.b16 %v48
    %v76 = vpack.c.b16 %v75, %v74
    %v94 = vunpack.c.l.b16 %v49
    %v95 = vunpack.c.l.b16 %v50
    %v96 = vunpack.c.l.b16 %v51
    %v97 = vunpack.c.l.b16 %v52
    %v98 = vunpack.c.l.b16 %v53
    %v99 = vunpack.c.l.b16 %v54
    %v100 = vunpack.c.l.b16 %v55
    %v101 = vunpack.c.l.b16 %v56
    %v102 = vunpack.c.l.b16 %v57
    %v103 = vunpack.c.l.b16 %v58
    %v104 = vunpack.c.l.b16 %v59
    %v105 = vunpack.c.l.b16 %v60
    %v106 = vunpack.c.l.b16 %v61
    %v107 = vunpack.c.l.b16 %v62
    %v108 = vunpack.c.l.b16 %v63
    %v109 = vunpack.c.l.b16 %v64
    %v110 = vpack.c.b16 %v95, %v94
    %v111 = vpack.c.b16 %v97, %v96
    %v112 = vpack.c.b16 %v99, %v98
    %v113 = vpack.c.b16 %v101, %v100
    %v114 = vpack.c.b16 %v103, %v102
    %v115 = vpack.c.b16 %v105, %v104
    %v116 = vpack.c.b16 %v107, %v106
    %v117 = vpack.c.b16 %v109, %v108
    %126 = vmatprep.subr.bf16.mxu0 0
    %127 = vmatpush1.bf16.msra.mxu0 %v110
    %128 = vmatprep.subr.bf16.mxu0 0
    %129 = vmatpush1.bf16.msra.mxu0 %v111
    %130 = vmatprep.subr.bf16.mxu0 0
    %131 = vmatpush1.bf16.msra.mxu0 %v112
    %132 = vmatprep.subr.bf16.mxu0 0
    %133 = vmatpush1.bf16.msra.mxu0 %v113
    %134 = vmatprep.subr.bf16.mxu0 0
    %135 = vmatpush1.bf16.msra.mxu0 %v114
    %136 = vmatprep.subr.bf16.mxu0 0
    %137 = vmatpush1.bf16.msra.mxu0 %v115
    %138 = vmatprep.subr.bf16.mxu0 0
    %139 = vmatpush1.bf16.msra.mxu0 %v116
    %140 = vmatprep.subr.bf16.mxu0 0
    %141 = vmatpush1.bf16.msra.mxu0 %v117
    %142 = vmatprep.subr.bf16.mxu0 0
    %143 = vmatpush1.bf16.msra.mxu0 0
    %144 = vmatprep.subr.bf16.mxu0 0
    %145 = vmatpush1.bf16.msra.mxu0 0
    %146 = vmatprep.subr.bf16.mxu0 0
    %147 = vmatpush1.bf16.msra.mxu0 0
    %148 = vmatprep.subr.bf16.mxu0 0
    %149 = vmatpush1.bf16.msra.mxu0 0
    %150 = vmatprep.subr.bf16.mxu0 0
    %151 = vmatpush1.bf16.msra.mxu0 0
    %152 = vmatprep.subr.bf16.mxu0 0
    %153 = vmatpush1.bf16.msra.mxu0 0
    %154 = vmatprep.subr.bf16.mxu0 0
    %155 = vmatpush1.bf16.msra.mxu0 0
    %156 = vmatprep.subr.bf16.mxu0 0
    %157 = vmatpush1.bf16.msra.mxu0 0
    %158 = vmatprep.mubr.bf16.mxu0 0
    %159 = vmatmul.mubr.bf16.gmra.mrb[0].mxu0 %v76
    %v160 = vpop.f32.mrb[0].mxu0
    %v161 = vadd.f32 %v70, %v160
    %v162 = vpop.f32.mrb[0].mxu0
    %v163 = vpop.f32.mrb[0].mxu0
    %v164 = vadd.f32 %v70, %v163
    %v165 = vpop.f32.mrb[0].mxu0
    %166 = vdwg.mxu0
    %vm167 = vcmask 785408
    %168 = vst.msk [vmem:[#allocation4] sm:$0xff] %vm167, %v161
    %vm169 = vcmask 783360
    %170 = vst.msk [vmem:[#allocation4 + $0x8] sm:$0x3f] %vm169, %v164
    %v171 = vld [vmem:[%s1] sm:$0xf]
    %v172 = vld [vmem:[%s1 + $0x4] sm:$0x7]
    %v173 = vld [vmem:[%s6] sm:$0xf]
    %v174 = vld [vmem:[%s6 + $0x4] sm:$0xf]
    %v175 = vld [vmem:[%s6 + $0x8] sm:$0xf]
    %v176 = vld [vmem:[%s6 + $0xc] sm:$0xf]
    %v177 = vld [vmem:[%s6 + $0x10] sm:$0xf]
    %v178 = vld [vmem:[%s6 + $0x14] sm:$0xf]
    %v179 = vld [vmem:[%s6 + $0x18] sm:$0xf]
    %v180 = vld [vmem:[%s6 + $0x1c] sm:$0xf]
    %v181 = vld [vmem:[%s8] sm:$0x1]
    %v183 = vlaneseq
    %v184 = vshrl.u32 %v183, 7
    %v185 = vsub.s32 0, %v184
    %v186 = vrot.slane %v181, %v185
    %v190 = vunpack.c.l.b16 %v171
    %v191 = vunpack.c.l.b16 %v172
    %v192 = vpack.c.b16 %v191, %v190
    %v201 = vunpack.c.l.b16 %v173
    %v202 = vunpack.c.l.b16 %v174
    %v203 = vunpack.c.l.b16 %v175
    %v204 = vunpack.c.l.b16 %v176
    %v205 = vunpack.c.l.b16 %v177
    %v206 = vunpack.c.l.b16 %v178
    %v207 = vunpack.c.l.b16 %v179
    %v208 = vunpack.c.l.b16 %v180
    %v209 = vpack.c.b16 %v202, %v201
    %v210 = vpack.c.b16 %v204, %v203
    %v211 = vpack.c.b16 %v206, %v205
    %v212 = vpack.c.b16 %v208, %v207
    %vm217 = vcmask 523264
    %v219 = vsel %vm217, %v192, 0
    %221 = vmatprep.subr.bf16.mxu0 0
    %222 = vmatpush1.bf16.msra.mxu0 %v209
    %223 = vmatprep.subr.bf16.mxu0 0
    %224 = vmatpush1.bf16.msra.mxu0 %v210
    %225 = vmatprep.subr.bf16.mxu0 0
    %226 = vmatpush1.bf16.msra.mxu0 %v211
    %227 = vmatprep.subr.bf16.mxu0 0
    %228 = vmatpush1.bf16.msra.mxu0 %v212
    %229 = vmatprep.subr.bf16.mxu0 0
    %230 = vmatpush1.bf16.msra.mxu0 0
    %231 = vmatprep.subr.bf16.mxu0 0
    %232 = vmatpush1.bf16.msra.mxu0 0
    %233 = vmatprep.subr.bf16.mxu0 0
    %234 = vmatpush1.bf16.msra.mxu0 0
    %235 = vmatprep.subr.bf16.mxu0 0
    %236 = vmatpush1.bf16.msra.mxu0 0
    %237 = vmatprep.subr.bf16.mxu0 0
    %238 = vmatpush1.bf16.msra.mxu0 0
    %239 = vmatprep.subr.bf16.mxu0 0
    %240 = vmatpush1.bf16.msra.mxu0 0
    %241 = vmatprep.subr.bf16.mxu0 0
    %242 = vmatpush1.bf16.msra.mxu0 0
    %243 = vmatprep.subr.bf16.mxu0 0
    %244 = vmatpush1.bf16.msra.mxu0 0
    %245 = vmatprep.subr.bf16.mxu0 0
    %246 = vmatpush1.bf16.msra.mxu0 0
    %247 = vmatprep.subr.bf16.mxu0 0
    %248 = vmatpush1.bf16.msra.mxu0 0
    %249 = vmatprep.subr.bf16.mxu0 0
    %250 = vmatpush1.bf16.msra.mxu0 0
    %251 = vmatprep.subr.bf16.mxu0 0
    %252 = vmatpush1.bf16.msra.mxu0 0
    %253 = vmatprep.mubr.bf16.mxu0 0
    %254 = vmatmul.mubr.bf16.gmra.mrb[0].mxu0 %v219
    %v255 = vpop.f32.mrb[0].mxu0
    %v256 = vadd.f32 %v186, %v255
    %v257 = vpop.f32.mrb[0].mxu0
    %v258 = vpop.f32.mrb[0].mxu0
    %v259 = vadd.f32 %v186, %v258
    %v260 = vpop.f32.mrb[0].mxu0
    %261 = vdwg.mxu0
    %262 = vst.msk [vmem:[#allocation5] sm:$0xff] %vm167, %v256
    %263 = vst.msk [vmem:[#allocation5 + $0x8] sm:$0x3f] %vm169, %v259
    %v264 = vld [vmem:[%s3] sm:$0xf]
    %v265 = vld [vmem:[%s3 + $0x4] sm:$0xf]
    %v266 = vld [vmem:[%s3 + $0x8] sm:$0xf]
    %v267 = vld [vmem:[%s3 + $0xc] sm:$0xf]
    %v268 = vld [vmem:[%s5] sm:$0x1]
    %v269 = vld [vmem:[%s7] sm:$0xf]
    %v270 = vld [vmem:[%s7 + $0x4] sm:$0xf]
    %v271 = vld [vmem:[%s7 + $0x8] sm:$0xf]
    %v272 = vld [vmem:[%s7 + $0xc] sm:$0xf]
    %v273 = vld [vmem:[%s9] sm:$0x1]
    %v274 = vld [vmem:[#allocation2] sm:$0x3]
    %v275 = vld [vmem:[#allocation3] sm:$0x3]
    %v276 = vpack.c.bf16 %v274, %v274
    %v278 = vlaneseq
    %v279 = vshrl.u32 %v278, 7
    %v280 = vsub.s32 0, %v279
    %v281 = vrot.slane %v268, %v280
    %v287 = vunpack.c.l.b16 %v264
    %v288 = vunpack.c.l.b16 %v265
    %v289 = vunpack.c.l.b16 %v266
    %v290 = vunpack.c.l.b16 %v267
    %v291 = vpack.c.b16 %v288, %v287
    %v292 = vpack.c.b16 %v290, %v289
    %vm295 = vcmask 261120
    %v297 = vsel %vm295, %v276, 0
    %299 = vmatprep.subr.bf16.mxu0 0
    %300 = vmatpush1.bf16.msra.mxu0 %v291
    %301 = vmatprep.subr.bf16.mxu0 0
    %302 = vmatpush1.bf16.msra.mxu0 %v292
    %303 = vmatprep.subr.bf16.mxu0 0
    %304 = vmatpush1.bf16.msra.mxu0 0
    %305 = vmatprep.subr.bf16.mxu0 0
    %306 = vmatpush1.bf16.msra.mxu0 0
    %307 = vmatprep.subr.bf16.mxu0 0
    %308 = vmatpush1.bf16.msra.mxu0 0
    %309 = vmatprep.subr.bf16.mxu0 0
    %310 = vmatpush1.bf16.msra.mxu0 0
    %311 = vmatprep.subr.bf16.mxu0 0
    %312 = vmatpush1.bf16.msra.mxu0 0
    %313 = vmatprep.subr.bf16.mxu0 0
    %314 = vmatpush1.bf16.msra.mxu0 0
    %315 = vmatprep.subr.bf16.mxu0 0
    %316 = vmatpush1.bf16.msra.mxu0 0
    %317 = vmatprep.subr.bf16.mxu0 0
    %318 = vmatpush1.bf16.msra.mxu0 0
    %319 = vmatprep.subr.bf16.mxu0 0
    %320 = vmatpush1.bf16.msra.mxu0 0
    %321 = vmatprep.subr.bf16.mxu0 0
    %322 = vmatpush1.bf16.msra.mxu0 0
    %323 = vmatprep.subr.bf16.mxu0 0
    %324 = vmatpush1.bf16.msra.mxu0 0
    %325 = vmatprep.subr.bf16.mxu0 0
    %326 = vmatpush1.bf16.msra.mxu0 0
    %327 = vmatprep.subr.bf16.mxu0 0
    %328 = vmatpush1.bf16.msra.mxu0 0
    %329 = vmatprep.subr.bf16.mxu0 0
    %330 = vmatpush1.bf16.msra.mxu0 0
    %331 = vmatprep.mubr.bf16.mxu0 0
    %332 = vmatmul.mubr.bf16.gmra.mrb[0].mxu0 %v297
    %v333 = vpop.f32.mrb[0].mxu0
    %v334 = vadd.f32 %v281, %v333
    %v335 = vpop.f32.mrb[0].mxu0
    %v336 = vpop.f32.mrb[0].mxu0
    %v337 = vpop.f32.mrb[0].mxu0
    %338 = vdwg.mxu0
    %v339 = vpack.c.bf16 %v275, %v275
    %v341 = vlaneseq
    %v342 = vshrl.u32 %v341, 7
    %v343 = vsub.s32 0, %v342
    %v344 = vrot.slane %v273, %v343
    %v350 = vunpack.c.l.b16 %v269
    %v351 = vunpack.c.l.b16 %v270
    %v352 = vunpack.c.l.b16 %v271
    %v353 = vunpack.c.l.b16 %v272
    %v354 = vpack.c.b16 %v351, %v350
    %v355 = vpack.c.b16 %v353, %v352
    %v359 = vsel %vm295, %v339, 0
    %361 = vmatprep.subr.bf16.mxu0 0
    %362 = vmatpush1.bf16.msra.mxu0 %v354
    %363 = vmatprep.subr.bf16.mxu0 0
    %364 = vmatpush1.bf16.msra.mxu0 %v355
    %365 = vmatprep.subr.bf16.mxu0 0
    %366 = vmatpush1.bf16.msra.mxu0 0
    %367 = vmatprep.subr.bf16.mxu0 0
    %368 = vmatpush1.bf16.msra.mxu0 0
    %369 = vmatprep.subr.bf16.mxu0 0
    %370 = vmatpush1.bf16.msra.mxu0 0
    %371 = vmatprep.subr.bf16.mxu0 0
    %372 = vmatpush1.bf16.msra.mxu0 0
    %373 = vmatprep.subr.bf16.mxu0 0
    %374 = vmatpush1.bf16.msra.mxu0 0
    %375 = vmatprep.subr.bf16.mxu0 0
    %376 = vmatpush1.bf16.msra.mxu0 0
    %377 = vmatprep.subr.bf16.mxu0 0
    %378 = vmatpush1.bf16.msra.mxu0 0
    %379 = vmatprep.subr.bf16.mxu0 0
    %380 = vmatpush1.bf16.msra.mxu0 0
    %381 = vmatprep.subr.bf16.mxu0 0
    %382 = vmatpush1.bf16.msra.mxu0 0
    %383 = vmatprep.subr.bf16.mxu0 0
    %384 = vmatpush1.bf16.msra.mxu0 0
    %385 = vmatprep.subr.bf16.mxu0 0
    %386 = vmatpush1.bf16.msra.mxu0 0
    %387 = vmatprep.subr.bf16.mxu0 0
    %388 = vmatpush1.bf16.msra.mxu0 0
    %389 = vmatprep.subr.bf16.mxu0 0
    %390 = vmatpush1.bf16.msra.mxu0 0
    %391 = vmatprep.subr.bf16.mxu0 0
    %392 = vmatpush1.bf16.msra.mxu0 0
    %393 = vmatprep.mubr.bf16.mxu0 0
    %394 = vmatmul.mubr.bf16.gmra.mrb[0].mxu0 %v359
    %v395 = vpop.f32.mrb[0].mxu0
    %v396 = vadd.f32 %v344, %v395
    %v397 = vpop.f32.mrb[0].mxu0
    %v398 = vpop.f32.mrb[0].mxu0
    %v399 = vpop.f32.mrb[0].mxu0
    %400 = vdwg.mxu0
    %v401 = vld [vmem:[#allocation4] sm:$0x3]
    %v402 = vadd.f32 %v401, %v334
    %v403 = vxor.u32 %v402, 2147483648
    %v404 = vmul.f32 %v403, 1.442695
    %v405 = vpow.pop %v404
    %v406 = vadd.f32 %v405, 1.0
    %v407 = vrcp.pop %v406
    %v408 = vmul.f32 1.0, %v407
    %410 = vrot.lane.b32.xlu0 %v334, 64
    %v411 = vpop.permute.xlu0 %410
    %v413 = vmul.f32 %v408, %v411
    %415 = vrot.lane.b32.xlu0 %v413, 64
    %v416 = vpop.permute.xlu0 %415
    %v418 = vadd.f32 %v401, %v416
    %v419 = vtanh.pop %v418
    %v420 = vsub.f32 1.0, %v408
    %422 = vrot.lane.b32.xlu0 %v419, 96
    %v423 = vpop.permute.xlu0 %422
    %v425 = vmul.f32 %v420, %v423
    %427 = vrot.lane.b32.xlu0 %v274, 32
    %v428 = vpop.permute.xlu0 %427
    %v430 = vmul.f32 %v408, %v428
    %v431 = vadd.f32 %v425, %v430
    %v432 = vld [vmem:[#allocation5] sm:$0x3]
    %v433 = vadd.f32 %v432, %v396
    %v434 = vxor.u32 %v433, 2147483648
    %v435 = vmul.f32 %v434, 1.442695
    %v436 = vpow.pop %v435
    %v437 = vadd.f32 %v436, 1.0
    %v438 = vrcp.pop %v437
    %v439 = vmul.f32 1.0, %v438
    %441 = vrot.lane.b32.xlu0 %v396, 64
    %v442 = vpop.permute.xlu0 %441
    %v444 = vmul.f32 %v439, %v442
    %446 = vrot.lane.b32.xlu0 %v444, 64
    %v447 = vpop.permute.xlu0 %446
    %v449 = vadd.f32 %v432, %v447
    %v450 = vtanh.pop %v449
    %v451 = vsub.f32 1.0, %v439
    %453 = vrot.lane.b32.xlu0 %v450, 96
    %v454 = vpop.permute.xlu0 %453
    %v456 = vmul.f32 %v451, %v454
    %458 = vrot.lane.b32.xlu0 %v275, 32
    %v459 = vpop.permute.xlu0 %458
    %v461 = vmul.f32 %v439, %v459
    %v462 = vadd.f32 %v456, %v461
    %464 = vrot.lane.b32.xlu0 %v431, 96
    %v465 = vpop.permute.xlu0 %464
    %vm467 = vcmask 254976
    %468 = vst.msk [vmem:[#allocation6] sm:$0x3] %vm467, %v465
    %470 = vrot.lane.b32.xlu0 %v462, 96
    %v471 = vpop.permute.xlu0 %470
    %473 = vst.msk [vmem:[#allocation8] sm:$0x3] %vm467, %v471
    %v474 = vpack.c.bf16 %v431, %v431
    %476 = vrot.lane.b32.xlu0 %v474, 96
    %v477 = vpop.permute.xlu0 %476
    %v479 = vsel %vm295, %v477, 0
    %481 = vmatprep.subr.bf16.mxu0 0
    %482 = vmatpush1.bf16.msra.mxu0 %v291
    %483 = vmatprep.subr.bf16.mxu0 0
    %484 = vmatpush1.bf16.msra.mxu0 %v292
    %485 = vmatprep.subr.bf16.mxu0 0
    %486 = vmatpush1.bf16.msra.mxu0 0
    %487 = vmatprep.subr.bf16.mxu0 0
    %488 = vmatpush1.bf16.msra.mxu0 0
    %489 = vmatprep.subr.bf16.mxu0 0
    %490 = vmatpush1.bf16.msra.mxu0 0
    %491 = vmatprep.subr.bf16.mxu0 0
    %492 = vmatpush1.bf16.msra.mxu0 0
    %493 = vmatprep.subr.bf16.mxu0 0
    %494 = vmatpush1.bf16.msra.mxu0 0
    %495 = vmatprep.subr.bf16.mxu0 0
    %496 = vmatpush1.bf16.msra.mxu0 0
    %497 = vmatprep.subr.bf16.mxu0 0
    %498 = vmatpush1.bf16.msra.mxu0 0
    %499 = vmatprep.subr.bf16.mxu0 0
    %500 = vmatpush1.bf16.msra.mxu0 0
    %501 = vmatprep.subr.bf16.mxu0 0
    %502 = vmatpush1.bf16.msra.mxu0 0
    %503 = vmatprep.subr.bf16.mxu0 0
    %504 = vmatpush1.bf16.msra.mxu0 0
    %505 = vmatprep.subr.bf16.mxu0 0
    %506 = vmatpush1.bf16.msra.mxu0 0
    %507 = vmatprep.subr.bf16.mxu0 0
    %508 = vmatpush1.bf16.msra.mxu0 0
    %509 = vmatprep.subr.bf16.mxu0 0
    %510 = vmatpush1.bf16.msra.mxu0 0
    %511 = vmatprep.subr.bf16.mxu0 0
    %512 = vmatpush1.bf16.msra.mxu0 0
    %513 = vmatprep.mubr.bf16.mxu0 0
    %514 = vmatmul.mubr.bf16.gmra.mrb[0].mxu0 %v479
    %v515 = vpop.f32.mrb[0].mxu0
    %v516 = vadd.f32 %v281, %v515
    %v517 = vpop.f32.mrb[0].mxu0
    %v518 = vpop.f32.mrb[0].mxu0
    %v519 = vpop.f32.mrb[0].mxu0
    %520 = vdwg.mxu0
    %v521 = vpack.c.bf16 %v462, %v462
    %523 = vrot.lane.b32.xlu0 %v521, 96
    %v524 = vpop.permute.xlu0 %523
    %v526 = vsel %vm295, %v524, 0
    %528 = vmatprep.subr.bf16.mxu0 0
    %529 = vmatpush1.bf16.msra.mxu0 %v354
    %530 = vmatprep.subr.bf16.mxu0 0
    %531 = vmatpush1.bf16.msra.mxu0 %v355
    %532 = vmatprep.subr.bf16.mxu0 0
    %533 = vmatpush1.bf16.msra.mxu0 0
    %534 = vmatprep.subr.bf16.mxu0 0
    %535 = vmatpush1.bf16.msra.mxu0 0
    %536 = vmatprep.subr.bf16.mxu0 0
    %537 = vmatpush1.bf16.msra.mxu0 0
    %538 = vmatprep.subr.bf16.mxu0 0
    %539 = vmatpush1.bf16.msra.mxu0 0
    %540 = vmatprep.subr.bf16.mxu0 0
    %541 = vmatpush1.bf16.msra.mxu0 0
    %542 = vmatprep.subr.bf16.mxu0 0
    %543 = vmatpush1.bf16.msra.mxu0 0
    %544 = vmatprep.subr.bf16.mxu0 0
    %545 = vmatpush1.bf16.msra.mxu0 0
    %546 = vmatprep.subr.bf16.mxu0 0
    %547 = vmatpush1.bf16.msra.mxu0 0
    %548 = vmatprep.subr.bf16.mxu0 0
    %549 = vmatpush1.bf16.msra.mxu0 0
    %550 = vmatprep.subr.bf16.mxu0 0
    %551 = vmatpush1.bf16.msra.mxu0 0
    %552 = vmatprep.subr.bf16.mxu0 0
    %553 = vmatpush1.bf16.msra.mxu0 0
    %554 = vmatprep.subr.bf16.mxu0 0
    %555 = vmatpush1.bf16.msra.mxu0 0
    %556 = vmatprep.subr.bf16.mxu0 0
    %557 = vmatpush1.bf16.msra.mxu0 0
    %558 = vmatprep.subr.bf16.mxu0 0
    %559 = vmatpush1.bf16.msra.mxu0 0
    %560 = vmatprep.mubr.bf16.mxu0 0
    %561 = vmatmul.mubr.bf16.gmra.mrb[0].mxu0 %v526
    %v562 = vpop.f32.mrb[0].mxu0
    %v563 = vadd.f32 %v344, %v562
    %v564 = vpop.f32.mrb[0].mxu0
    %v565 = vpop.f32.mrb[0].mxu0
    %v566 = vpop.f32.mrb[0].mxu0
    %567 = vdwg.mxu0
    %v568 = vld [vmem:[#allocation4 + $0x2] sm:$0x3]
    %v569 = vadd.f32 %v568, %v516
    %v570 = vxor.u32 %v569, 2147483648
    %v571 = vmul.f32 %v570, 1.442695
    %v572 = vpow.pop %v571
    %v573 = vadd.f32 %v572, 1.0
    %v574 = vrcp.pop %v573
    %v575 = vmul.f32 1.0, %v574
    %577 = vrot.lane.b32.xlu0 %v516, 64
    %v578 = vpop.permute.xlu0 %577
    %v580 = vmul.f32 %v575, %v578
    %582 = vrot.lane.b32.xlu0 %v580, 64
    %v583 = vpop.permute.xlu0 %582
    %v585 = vadd.f32 %v568, %v583
    %v586 = vtanh.pop %v585
    %v587 = vsub.f32 1.0, %v575
    %589 = vrot.lane.b32.xlu0 %v586, 96
    %v590 = vpop.permute.xlu0 %589
    %v592 = vmul.f32 %v587, %v590
    %v593 = vmul.f32 %v575, %v431
    %v594 = vadd.f32 %v592, %v593
    %v595 = vld [vmem:[#allocation5 + $0x2] sm:$0x3]
    %v596 = vadd.f32 %v595, %v563
    %v597 = vxor.u32 %v596, 2147483648
    %v598 = vmul.f32 %v597, 1.442695
    %v599 = vpow.pop %v598
    %v600 = vadd.f32 %v599, 1.0
    %v601 = vrcp.pop %v600
    %v602 = vmul.f32 1.0, %v601
    %604 = vrot.lane.b32.xlu0 %v563, 64
    %v605 = vpop.permute.xlu0 %604
    %v607 = vmul.f32 %v602, %v605
    %609 = vrot.lane.b32.xlu0 %v607, 64
    %v610 = vpop.permute.xlu0 %609
    %v612 = vadd.f32 %v595, %v610
    %v613 = vtanh.pop %v612
    %v614 = vsub.f32 1.0, %v602
    %616 = vrot.lane.b32.xlu0 %v613, 96
    %v617 = vpop.permute.xlu0 %616
    %v619 = vmul.f32 %v614, %v617
    %v620 = vmul.f32 %v602, %v462
    %v621 = vadd.f32 %v619, %v620
    %623 = vrot.lane.b32.xlu0 %v594, 96
    %v624 = vpop.permute.xlu0 %623
    %s626 = scalar_lea.vmem [#allocation6], 2
    %627 = vst.msk [vmem:[%s626] sm:$0x3] %vm467, %v624
    %629 = vrot.lane.b32.xlu0 %v621, 96
    %v630 = vpop.permute.xlu0 %629
    %s632 = scalar_lea.vmem [#allocation8], 2
    %633 = vst.msk [vmem:[%s632] sm:$0x3] %vm467, %v630
    %v634 = vpack.c.bf16 %v594, %v594
    %636 = vrot.lane.b32.xlu0 %v634, 96
    %v637 = vpop.permute.xlu0 %636
    %v639 = vsel %vm295, %v637, 0
    %641 = vmatprep.subr.bf16.mxu0 0
    %642 = vmatpush1.bf16.msra.mxu0 %v291
    %643 = vmatprep.subr.bf16.mxu0 0
    %644 = vmatpush1.bf16.msra.mxu0 %v292
    %645 = vmatprep.subr.bf16.mxu0 0
    %646 = vmatpush1.bf16.msra.mxu0 0
    %647 = vmatprep.subr.bf16.mxu0 0
    %648 = vmatpush1.bf16.msra.mxu0 0
    %649 = vmatprep.subr.bf16.mxu0 0
    %650 = vmatpush1.bf16.msra.mxu0 0
    %651 = vmatprep.subr.bf16.mxu0 0
    %652 = vmatpush1.bf16.msra.mxu0 0
    %653 = vmatprep.subr.bf16.mxu0 0
    %654 = vmatpush1.bf16.msra.mxu0 0
    %655 = vmatprep.subr.bf16.mxu0 0
    %656 = vmatpush1.bf16.msra.mxu0 0
    %657 = vmatprep.subr.bf16.mxu0 0
    %658 = vmatpush1.bf16.msra.mxu0 0
    %659 = vmatprep.subr.bf16.mxu0 0
    %660 = vmatpush1.bf16.msra.mxu0 0
    %661 = vmatprep.subr.bf16.mxu0 0
    %662 = vmatpush1.bf16.msra.mxu0 0
    %663 = vmatprep.subr.bf16.mxu0 0
    %664 = vmatpush1.bf16.msra.mxu0 0
    %665 = vmatprep.subr.bf16.mxu0 0
    %666 = vmatpush1.bf16.msra.mxu0 0
    %667 = vmatprep.subr.bf16.mxu0 0
    %668 = vmatpush1.bf16.msra.mxu0 0
    %669 = vmatprep.subr.bf16.mxu0 0
    %670 = vmatpush1.bf16.msra.mxu0 0
    %671 = vmatprep.subr.bf16.mxu0 0
    %672 = vmatpush1.bf16.msra.mxu0 0
    %673 = vmatprep.mubr.bf16.mxu0 0
    %674 = vmatmul.mubr.bf16.gmra.mrb[0].mxu0 %v639
    %v675 = vpop.f32.mrb[0].mxu0
    %v676 = vadd.f32 %v281, %v675
    %v677 = vpop.f32.mrb[0].mxu0
    %v678 = vpop.f32.mrb[0].mxu0
    %v679 = vpop.f32.mrb[0].mxu0
    %680 = vdwg.mxu0
    %v681 = vpack.c.bf16 %v621, %v621
    %683 = vrot.lane.b32.xlu0 %v681, 96
    %v684 = vpop.permute.xlu0 %683
    %v686 = vsel %vm295, %v684, 0
    %688 = vmatprep.subr.bf16.mxu0 0
    %689 = vmatpush1.bf16.msra.mxu0 %v354
    %690 = vmatprep.subr.bf16.mxu0 0
    %691 = vmatpush1.bf16.msra.mxu0 %v355
    %692 = vmatprep.subr.bf16.mxu0 0
    %693 = vmatpush1.bf16.msra.mxu0 0
    %694 = vmatprep.subr.bf16.mxu0 0
    %695 = vmatpush1.bf16.msra.mxu0 0
    %696 = vmatprep.subr.bf16.mxu0 0
    %697 = vmatpush1.bf16.msra.mxu0 0
    %698 = vmatprep.subr.bf16.mxu0 0
    %699 = vmatpush1.bf16.msra.mxu0 0
    %700 = vmatprep.subr.bf16.mxu0 0
    %701 = vmatpush1.bf16.msra.mxu0 0
    %702 = vmatprep.subr.bf16.mxu0 0
    %703 = vmatpush1.bf16.msra.mxu0 0
    %704 = vmatprep.subr.bf16.mxu0 0
    %705 = vmatpush1.bf16.msra.mxu0 0
    %706 = vmatprep.subr.bf16.mxu0 0
    %707 = vmatpush1.bf16.msra.mxu0 0
    %708 = vmatprep.subr.bf16.mxu0 0
    %709 = vmatpush1.bf16.msra.mxu0 0
    %710 = vmatprep.subr.bf16.mxu0 0
    %711 = vmatpush1.bf16.msra.mxu0 0
    %712 = vmatprep.subr.bf16.mxu0 0
    %713 = vmatpush1.bf16.msra.mxu0 0
    %714 = vmatprep.subr.bf16.mxu0 0
    %715 = vmatpush1.bf16.msra.mxu0 0
    %716 = vmatprep.subr.bf16.mxu0 0
    %717 = vmatpush1.bf16.msra.mxu0 0
    %718 = vmatprep.subr.bf16.mxu0 0
    %719 = vmatpush1.bf16.msra.mxu0 0
    %720 = vmatprep.mubr.bf16.mxu0 0
    %721 = vmatmul.mubr.bf16.gmra.mrb[0].mxu0 %v686
    %v722 = vpop.f32.mrb[0].mxu0
    %v723 = vadd.f32 %v344, %v722
    %v724 = vpop.f32.mrb[0].mxu0
    %v725 = vpop.f32.mrb[0].mxu0
    %v726 = vpop.f32.mrb[0].mxu0
    %727 = vdwg.mxu0
    %v728 = vld [vmem:[#allocation4 + $0x4] sm:$0x3]
    %v729 = vadd.f32 %v728, %v676
    %v730 = vxor.u32 %v729, 2147483648
    %v731 = vmul.f32 %v730, 1.442695
    %v732 = vpow.pop %v731
    %v733 = vadd.f32 %v732, 1.0
    %v734 = vrcp.pop %v733
    %v735 = vmul.f32 1.0, %v734
    %737 = vrot.lane.b32.xlu0 %v676, 64
    %v738 = vpop.permute.xlu0 %737
    %v740 = vmul.f32 %v735, %v738
    %742 = vrot.lane.b32.xlu0 %v740, 64
    %v743 = vpop.permute.xlu0 %742
    %v745 = vadd.f32 %v728, %v743
    %v746 = vtanh.pop %v745
    %v747 = vsub.f32 1.0, %v735
    %749 = vrot.lane.b32.xlu0 %v746, 96
    %v750 = vpop.permute.xlu0 %749
    %v752 = vmul.f32 %v747, %v750
    %v753 = vmul.f32 %v735, %v594
    %v754 = vadd.f32 %v752, %v753
    %v755 = vld [vmem:[#allocation5 + $0x4] sm:$0x3]
    %v756 = vadd.f32 %v755, %v723
    %v757 = vxor.u32 %v756, 2147483648
    %v758 = vmul.f32 %v757, 1.442695
    %v759 = vpow.pop %v758
    %v760 = vadd.f32 %v759, 1.0
    %v761 = vrcp.pop %v760
    %v762 = vmul.f32 1.0, %v761
    %764 = vrot.lane.b32.xlu0 %v723, 64
    %v765 = vpop.permute.xlu0 %764
    %v767 = vmul.f32 %v762, %v765
    %769 = vrot.lane.b32.xlu0 %v767, 64
    %v770 = vpop.permute.xlu0 %769
    %v772 = vadd.f32 %v755, %v770
    %v773 = vtanh.pop %v772
    %v774 = vsub.f32 1.0, %v762
    %776 = vrot.lane.b32.xlu0 %v773, 96
    %v777 = vpop.permute.xlu0 %776
    %v779 = vmul.f32 %v774, %v777
    %v780 = vmul.f32 %v762, %v621
    %v781 = vadd.f32 %v779, %v780
    %783 = vrot.lane.b32.xlu0 %v754, 96
    %v784 = vpop.permute.xlu0 %783
    %s786 = scalar_lea.vmem [#allocation6], 4
    %787 = vst.msk [vmem:[%s786] sm:$0x3] %vm467, %v784
    %789 = vrot.lane.b32.xlu0 %v781, 96
    %v790 = vpop.permute.xlu0 %789
    %s792 = scalar_lea.vmem [#allocation8], 4
    %793 = vst.msk [vmem:[%s792] sm:$0x3] %vm467, %v790
    %v794 = vpack.c.bf16 %v754, %v754
    %796 = vrot.lane.b32.xlu0 %v794, 96
    %v797 = vpop.permute.xlu0 %796
    %v799 = vsel %vm295, %v797, 0
    %801 = vmatprep.subr.bf16.mxu0 0
    %802 = vmatpush1.bf16.msra.mxu0 %v291
    %803 = vmatprep.subr.bf16.mxu0 0
    %804 = vmatpush1.bf16.msra.mxu0 %v292
    %805 = vmatprep.subr.bf16.mxu0 0
    %806 = vmatpush1.bf16.msra.mxu0 0
    %807 = vmatprep.subr.bf16.mxu0 0
    %808 = vmatpush1.bf16.msra.mxu0 0
    %809 = vmatprep.subr.bf16.mxu0 0
    %810 = vmatpush1.bf16.msra.mxu0 0
    %811 = vmatprep.subr.bf16.mxu0 0
    %812 = vmatpush1.bf16.msra.mxu0 0
    %813 = vmatprep.subr.bf16.mxu0 0
    %814 = vmatpush1.bf16.msra.mxu0 0
    %815 = vmatprep.subr.bf16.mxu0 0
    %816 = vmatpush1.bf16.msra.mxu0 0
    %817 = vmatprep.subr.bf16.mxu0 0
    %818 = vmatpush1.bf16.msra.mxu0 0
    %819 = vmatprep.subr.bf16.mxu0 0
    %820 = vmatpush1.bf16.msra.mxu0 0
    %821 = vmatprep.subr.bf16.mxu0 0
    %822 = vmatpush1.bf16.msra.mxu0 0
    %823 = vmatprep.subr.bf16.mxu0 0
    %824 = vmatpush1.bf16.msra.mxu0 0
    %825 = vmatprep.subr.bf16.mxu0 0
    %826 = vmatpush1.bf16.msra.mxu0 0
    %827 = vmatprep.subr.bf16.mxu0 0
    %828 = vmatpush1.bf16.msra.mxu0 0
    %829 = vmatprep.subr.bf16.mxu0 0
    %830 = vmatpush1.bf16.msra.mxu0 0
    %831 = vmatprep.subr.bf16.mxu0 0
    %832 = vmatpush1.bf16.msra.mxu0 0
    %833 = vmatprep.mubr.bf16.mxu0 0
    %834 = vmatmul.mubr.bf16.gmra.mrb[0].mxu0 %v799
    %v835 = vpop.f32.mrb[0].mxu0
    %v836 = vadd.f32 %v281, %v835
    %v837 = vpop.f32.mrb[0].mxu0
    %v838 = vpop.f32.mrb[0].mxu0
    %v839 = vpop.f32.mrb[0].mxu0
    %840 = vdwg.mxu0
    %v841 = vpack.c.bf16 %v781, %v781
    %843 = vrot.lane.b32.xlu0 %v841, 96
    %v844 = vpop.permute.xlu0 %843
    %v846 = vsel %vm295, %v844, 0
    %848 = vmatprep.subr.bf16.mxu0 0
    %849 = vmatpush1.bf16.msra.mxu0 %v354
    %850 = vmatprep.subr.bf16.mxu0 0
    %851 = vmatpush1.bf16.msra.mxu0 %v355
    %852 = vmatprep.subr.bf16.mxu0 0
    %853 = vmatpush1.bf16.msra.mxu0 0
    %854 = vmatprep.subr.bf16.mxu0 0
    %855 = vmatpush1.bf16.msra.mxu0 0
    %856 = vmatprep.subr.bf16.mxu0 0
    %857 = vmatpush1.bf16.msra.mxu0 0
    %858 = vmatprep.subr.bf16.mxu0 0
    %859 = vmatpush1.bf16.msra.mxu0 0
    %860 = vmatprep.subr.bf16.mxu0 0
    %861 = vmatpush1.bf16.msra.mxu0 0
    %862 = vmatprep.subr.bf16.mxu0 0
    %863 = vmatpush1.bf16.msra.mxu0 0
    %864 = vmatprep.subr.bf16.mxu0 0
    %865 = vmatpush1.bf16.msra.mxu0 0
    %866 = vmatprep.subr.bf16.mxu0 0
    %867 = vmatpush1.bf16.msra.mxu0 0
    %868 = vmatprep.subr.bf16.mxu0 0
    %869 = vmatpush1.bf16.msra.mxu0 0
    %870 = vmatprep.subr.bf16.mxu0 0
    %871 = vmatpush1.bf16.msra.mxu0 0
    %872 = vmatprep.subr.bf16.mxu0 0
    %873 = vmatpush1.bf16.msra.mxu0 0
    %874 = vmatprep.subr.bf16.mxu0 0
    %875 = vmatpush1.bf16.msra.mxu0 0
    %876 = vmatprep.subr.bf16.mxu0 0
    %877 = vmatpush1.bf16.msra.mxu0 0
    %878 = vmatprep.subr.bf16.mxu0 0
    %879 = vmatpush1.bf16.msra.mxu0 0
    %880 = vmatprep.mubr.bf16.mxu0 0
    %881 = vmatmul.mubr.bf16.gmra.mrb[0].mxu0 %v846
    %v882 = vpop.f32.mrb[0].mxu0
    %v883 = vadd.f32 %v344, %v882
    %v884 = vpop.f32.mrb[0].mxu0
    %v885 = vpop.f32.mrb[0].mxu0
    %v886 = vpop.f32.mrb[0].mxu0
    %887 = vdwg.mxu0
    %v888 = vld [vmem:[#allocation4 + $0x6] sm:$0x3]
    %v889 = vadd.f32 %v888, %v836
    %v890 = vxor.u32 %v889, 2147483648
    %v891 = vmul.f32 %v890, 1.442695
    %v892 = vpow.pop %v891
    %v893 = vadd.f32 %v892, 1.0
    %v894 = vrcp.pop %v893
    %v895 = vmul.f32 1.0, %v894
    %897 = vrot.lane.b32.xlu0 %v836, 64
    %v898 = vpop.permute.xlu0 %897
    %v900 = vmul.f32 %v895, %v898
    %902 = vrot.lane.b32.xlu0 %v900, 64
    %v903 = vpop.permute.xlu0 %902
    %v905 = vadd.f32 %v888, %v903
    %v906 = vtanh.pop %v905
    %v907 = vsub.f32 1.0, %v895
    %909 = vrot.lane.b32.xlu0 %v906, 96
    %v910 = vpop.permute.xlu0 %909
    %v912 = vmul.f32 %v907, %v910
    %v913 = vmul.f32 %v895, %v754
    %v914 = vadd.f32 %v912, %v913
    %v915 = vld [vmem:[#allocation5 + $0x6] sm:$0x3]
    %v916 = vadd.f32 %v915, %v883
    %v917 = vxor.u32 %v916, 2147483648
    %v918 = vmul.f32 %v917, 1.442695
    %v919 = vpow.pop %v918
    %v920 = vadd.f32 %v919, 1.0
    %v921 = vrcp.pop %v920
    %v922 = vmul.f32 1.0, %v921
    %924 = vrot.lane.b32.xlu0 %v883, 64
    %v925 = vpop.permute.xlu0 %924
    %v927 = vmul.f32 %v922, %v925
    %929 = vrot.lane.b32.xlu0 %v927, 64
    %v930 = vpop.permute.xlu0 %929
    %v932 = vadd.f32 %v915, %v930
    %v933 = vtanh.pop %v932
    %v934 = vsub.f32 1.0, %v922
    %936 = vrot.lane.b32.xlu0 %v933, 96
    %v937 = vpop.permute.xlu0 %936
    %v939 = vmul.f32 %v934, %v937
    %v940 = vmul.f32 %v922, %v781
    %v941 = vadd.f32 %v939, %v940
    %943 = vrot.lane.b32.xlu0 %v914, 96
    %v944 = vpop.permute.xlu0 %943
    %s946 = scalar_lea.vmem [#allocation6], 6
    %947 = vst.msk [vmem:[%s946] sm:$0x3] %vm467, %v944
    %949 = vrot.lane.b32.xlu0 %v941, 96
    %v950 = vpop.permute.xlu0 %949
    %s952 = scalar_lea.vmem [#allocation8], 6
    %953 = vst.msk [vmem:[%s952] sm:$0x3] %vm467, %v950
    %v954 = vpack.c.bf16 %v914, %v914
    %956 = vrot.lane.b32.xlu0 %v954, 96
    %v957 = vpop.permute.xlu0 %956
    %v959 = vsel %vm295, %v957, 0
    %961 = vmatprep.subr.bf16.mxu0 0
    %962 = vmatpush1.bf16.msra.mxu0 %v291
    %963 = vmatprep.subr.bf16.mxu0 0
    %964 = vmatpush1.bf16.msra.mxu0 %v292
    %965 = vmatprep.subr.bf16.mxu0 0
    %966 = vmatpush1.bf16.msra.mxu0 0
    %967 = vmatprep.subr.bf16.mxu0 0
    %968 = vmatpush1.bf16.msra.mxu0 0
    %969 = vmatprep.subr.bf16.mxu0 0
    %970 = vmatpush1.bf16.msra.mxu0 0
    %971 = vmatprep.subr.bf16.mxu0 0
    %972 = vmatpush1.bf16.msra.mxu0 0
    %973 = vmatprep.subr.bf16.mxu0 0
    %974 = vmatpush1.bf16.msra.mxu0 0
    %975 = vmatprep.subr.bf16.mxu0 0
    %976 = vmatpush1.bf16.msra.mxu0 0
    %977 = vmatprep.subr.bf16.mxu0 0
    %978 = vmatpush1.bf16.msra.mxu0 0
    %979 = vmatprep.subr.bf16.mxu0 0
    %980 = vmatpush1.bf16.msra.mxu0 0
    %981 = vmatprep.subr.bf16.mxu0 0
    %982 = vmatpush1.bf16.msra.mxu0 0
    %983 = vmatprep.subr.bf16.mxu0 0
    %984 = vmatpush1.bf16.msra.mxu0 0
    %985 = vmatprep.subr.bf16.mxu0 0
    %986 = vmatpush1.bf16.msra.mxu0 0
    %987 = vmatprep.subr.bf16.mxu0 0
    %988 = vmatpush1.bf16.msra.mxu0 0
    %989 = vmatprep.subr.bf16.mxu0 0
    %990 = vmatpush1.bf16.msra.mxu0 0
    %991 = vmatprep.subr.bf16.mxu0 0
    %992 = vmatpush1.bf16.msra.mxu0 0
    %993 = vmatprep.mubr.bf16.mxu0 0
    %994 = vmatmul.mubr.bf16.gmra.mrb[0].mxu0 %v959
    %v995 = vpop.f32.mrb[0].mxu0
    %v996 = vadd.f32 %v281, %v995
    %v997 = vpop.f32.mrb[0].mxu0
    %v998 = vpop.f32.mrb[0].mxu0
    %v999 = vpop.f32.mrb[0].mxu0
    %1000 = vdwg.mxu0
    %v1001 = vpack.c.bf16 %v941, %v941
    %1003 = vrot.lane.b32.xlu0 %v1001, 96
    %v1004 = vpop.permute.xlu0 %1003
    %v1006 = vsel %vm295, %v1004, 0
    %1008 = vmatprep.subr.bf16.mxu0 0
    %1009 = vmatpush1.bf16.msra.mxu0 %v354
    %1010 = vmatprep.subr.bf16.mxu0 0
    %1011 = vmatpush1.bf16.msra.mxu0 %v355
    %1012 = vmatprep.subr.bf16.mxu0 0
    %1013 = vmatpush1.bf16.msra.mxu0 0
    %1014 = vmatprep.subr.bf16.mxu0 0
    %1015 = vmatpush1.bf16.msra.mxu0 0
    %1016 = vmatprep.subr.bf16.mxu0 0
    %1017 = vmatpush1.bf16.msra.mxu0 0
    %1018 = vmatprep.subr.bf16.mxu0 0
    %1019 = vmatpush1.bf16.msra.mxu0 0
    %1020 = vmatprep.subr.bf16.mxu0 0
    %1021 = vmatpush1.bf16.msra.mxu0 0
    %1022 = vmatprep.subr.bf16.mxu0 0
    %1023 = vmatpush1.bf16.msra.mxu0 0
    %1024 = vmatprep.subr.bf16.mxu0 0
    %1025 = vmatpush1.bf16.msra.mxu0 0
    %1026 = vmatprep.subr.bf16.mxu0 0
    %1027 = vmatpush1.bf16.msra.mxu0 0
    %1028 = vmatprep.subr.bf16.mxu0 0
    %1029 = vmatpush1.bf16.msra.mxu0 0
    %1030 = vmatprep.subr.bf16.mxu0 0
    %1031 = vmatpush1.bf16.msra.mxu0 0
    %1032 = vmatprep.subr.bf16.mxu0 0
    %1033 = vmatpush1.bf16.msra.mxu0 0
    %1034 = vmatprep.subr.bf16.mxu0 0
    %1035 = vmatpush1.bf16.msra.mxu0 0
    %1036 = vmatprep.subr.bf16.mxu0 0
    %1037 = vmatpush1.bf16.msra.mxu0 0
    %1038 = vmatprep.subr.bf16.mxu0 0
    %1039 = vmatpush1.bf16.msra.mxu0 0
    %1040 = vmatprep.mubr.bf16.mxu0 0
    %1041 = vmatmul.mubr.bf16.gmra.mrb[0].mxu0 %v1006
    %v1042 = vpop.f32.mrb[0].mxu0
    %v1043 = vadd.f32 %v344, %v1042
    %v1044 = vpop.f32.mrb[0].mxu0
    %v1045 = vpop.f32.mrb[0].mxu0
    %v1046 = vpop.f32.mrb[0].mxu0
    %1047 = vdwg.mxu0
    %v1048 = vld [vmem:[#allocation4 + $0x8] sm:$0x3]
    %v1049 = vadd.f32 %v1048, %v996
    %v1050 = vxor.u32 %v1049, 2147483648
    %v1051 = vmul.f32 %v1050, 1.442695
    %v1052 = vpow.pop %v1051
    %v1053 = vadd.f32 %v1052, 1.0
    %v1054 = vrcp.pop %v1053
    %v1055 = vmul.f32 1.0, %v1054
    %1057 = vrot.lane.b32.xlu0 %v996, 64
    %v1058 = vpop.permute.xlu0 %1057
    %v1060 = vmul.f32 %v1055, %v1058
    %1062 = vrot.lane.b32.xlu0 %v1060, 64
    %v1063 = vpop.permute.xlu0 %1062
    %v1065 = vadd.f32 %v1048, %v1063
    %v1066 = vtanh.pop %v1065
    %v1067 = vsub.f32 1.0, %v1055
    %1069 = vrot.lane.b32.xlu0 %v1066, 96
    %v1070 = vpop.permute.xlu0 %1069
    %v1072 = vmul.f32 %v1067, %v1070
    %v1073 = vmul.f32 %v1055, %v914
    %v1074 = vadd.f32 %v1072, %v1073
    %v1075 = vld [vmem:[#allocation5 + $0x8] sm:$0x3]
    %v1076 = vadd.f32 %v1075, %v1043
    %v1077 = vxor.u32 %v1076, 2147483648
    %v1078 = vmul.f32 %v1077, 1.442695
    %v1079 = vpow.pop %v1078
    %v1080 = vadd.f32 %v1079, 1.0
    %v1081 = vrcp.pop %v1080
    %v1082 = vmul.f32 1.0, %v1081
    %1084 = vrot.lane.b32.xlu0 %v1043, 64
    %v1085 = vpop.permute.xlu0 %1084
    %v1087 = vmul.f32 %v1082, %v1085
    %1089 = vrot.lane.b32.xlu0 %v1087, 64
    %v1090 = vpop.permute.xlu0 %1089
    %v1092 = vadd.f32 %v1075, %v1090
    %v1093 = vtanh.pop %v1092
    %v1094 = vsub.f32 1.0, %v1082
    %1096 = vrot.lane.b32.xlu0 %v1093, 96
    %v1097 = vpop.permute.xlu0 %1096
    %v1099 = vmul.f32 %v1094, %v1097
    %v1100 = vmul.f32 %v1082, %v941
    %v1101 = vadd.f32 %v1099, %v1100
    %1103 = vrot.lane.b32.xlu0 %v1074, 96
    %v1104 = vpop.permute.xlu0 %1103
    %s1106 = scalar_lea.vmem [#allocation6], 8
    %1107 = vst.msk [vmem:[%s1106] sm:$0x3] %vm467, %v1104
    %1109 = vrot.lane.b32.xlu0 %v1101, 96
    %v1110 = vpop.permute.xlu0 %1109
    %s1112 = scalar_lea.vmem [#allocation8], 8
    %1113 = vst.msk [vmem:[%s1112] sm:$0x3] %vm467, %v1110
    %v1114 = vpack.c.bf16 %v1074, %v1074
    %1116 = vrot.lane.b32.xlu0 %v1114, 96
    %v1117 = vpop.permute.xlu0 %1116
    %v1119 = vsel %vm295, %v1117, 0
    %1121 = vmatprep.subr.bf16.mxu0 0
    %1122 = vmatpush1.bf16.msra.mxu0 %v291
    %1123 = vmatprep.subr.bf16.mxu0 0
    %1124 = vmatpush1.bf16.msra.mxu0 %v292
    %1125 = vmatprep.subr.bf16.mxu0 0
    %1126 = vmatpush1.bf16.msra.mxu0 0
    %1127 = vmatprep.subr.bf16.mxu0 0
    %1128 = vmatpush1.bf16.msra.mxu0 0
    %1129 = vmatprep.subr.bf16.mxu0 0
    %1130 = vmatpush1.bf16.msra.mxu0 0
    %1131 = vmatprep.subr.bf16.mxu0 0
    %1132 = vmatpush1.bf16.msra.mxu0 0
    %1133 = vmatprep.subr.bf16.mxu0 0
    %1134 = vmatpush1.bf16.msra.mxu0 0
    %1135 = vmatprep.subr.bf16.mxu0 0
    %1136 = vmatpush1.bf16.msra.mxu0 0
    %1137 = vmatprep.subr.bf16.mxu0 0
    %1138 = vmatpush1.bf16.msra.mxu0 0
    %1139 = vmatprep.subr.bf16.mxu0 0
    %1140 = vmatpush1.bf16.msra.mxu0 0
    %1141 = vmatprep.subr.bf16.mxu0 0
    %1142 = vmatpush1.bf16.msra.mxu0 0
    %1143 = vmatprep.subr.bf16.mxu0 0
    %1144 = vmatpush1.bf16.msra.mxu0 0
    %1145 = vmatprep.subr.bf16.mxu0 0
    %1146 = vmatpush1.bf16.msra.mxu0 0
    %1147 = vmatprep.subr.bf16.mxu0 0
    %1148 = vmatpush1.bf16.msra.mxu0 0
    %1149 = vmatprep.subr.bf16.mxu0 0
    %1150 = vmatpush1.bf16.msra.mxu0 0
    %1151 = vmatprep.subr.bf16.mxu0 0
    %1152 = vmatpush1.bf16.msra.mxu0 0
    %1153 = vmatprep.mubr.bf16.mxu0 0
    %1154 = vmatmul.mubr.bf16.gmra.mrb[0].mxu0 %v1119
    %v1155 = vpop.f32.mrb[0].mxu0
    %v1156 = vadd.f32 %v281, %v1155
    %v1157 = vpop.f32.mrb[0].mxu0
    %v1158 = vpop.f32.mrb[0].mxu0
    %v1159 = vpop.f32.mrb[0].mxu0
    %1160 = vdwg.mxu0
    %v1161 = vpack.c.bf16 %v1101, %v1101
    %1163 = vrot.lane.b32.xlu0 %v1161, 96
    %v1164 = vpop.permute.xlu0 %1163
    %v1166 = vsel %vm295, %v1164, 0
    %1168 = vmatprep.subr.bf16.mxu0 0
    %1169 = vmatpush1.bf16.msra.mxu0 %v354
    %1170 = vmatprep.subr.bf16.mxu0 0
    %1171 = vmatpush1.bf16.msra.mxu0 %v355
    %1172 = vmatprep.subr.bf16.mxu0 0
    %1173 = vmatpush1.bf16.msra.mxu0 0
    %1174 = vmatprep.subr.bf16.mxu0 0
    %1175 = vmatpush1.bf16.msra.mxu0 0
    %1176 = vmatprep.subr.bf16.mxu0 0
    %1177 = vmatpush1.bf16.msra.mxu0 0
    %1178 = vmatprep.subr.bf16.mxu0 0
    %1179 = vmatpush1.bf16.msra.mxu0 0
    %1180 = vmatprep.subr.bf16.mxu0 0
    %1181 = vmatpush1.bf16.msra.mxu0 0
    %1182 = vmatprep.subr.bf16.mxu0 0
    %1183 = vmatpush1.bf16.msra.mxu0 0
    %1184 = vmatprep.subr.bf16.mxu0 0
    %1185 = vmatpush1.bf16.msra.mxu0 0
    %1186 = vmatprep.subr.bf16.mxu0 0
    %1187 = vmatpush1.bf16.msra.mxu0 0
    %1188 = vmatprep.subr.bf16.mxu0 0
    %1189 = vmatpush1.bf16.msra.mxu0 0
    %1190 = vmatprep.subr.bf16.mxu0 0
    %1191 = vmatpush1.bf16.msra.mxu0 0
    %1192 = vmatprep.subr.bf16.mxu0 0
    %1193 = vmatpush1.bf16.msra.mxu0 0
    %1194 = vmatprep.subr.bf16.mxu0 0
    %1195 = vmatpush1.bf16.msra.mxu0 0
    %1196 = vmatprep.subr.bf16.mxu0 0
    %1197 = vmatpush1.bf16.msra.mxu0 0
    %1198 = vmatprep.subr.bf16.mxu0 0
    %1199 = vmatpush1.bf16.msra.mxu0 0
    %1200 = vmatprep.mubr.bf16.mxu0 0
    %1201 = vmatmul.mubr.bf16.gmra.mrb[0].mxu0 %v1166
    %v1202 = vpop.f32.mrb[0].mxu0
    %v1203 = vadd.f32 %v344, %v1202
    %v1204 = vpop.f32.mrb[0].mxu0
    %v1205 = vpop.f32.mrb[0].mxu0
    %v1206 = vpop.f32.mrb[0].mxu0
    %1207 = vdwg.mxu0
    %v1208 = vld [vmem:[#allocation4 + $0xa] sm:$0x3]
    %v1209 = vadd.f32 %v1208, %v1156
    %v1210 = vxor.u32 %v1209, 2147483648
    %v1211 = vmul.f32 %v1210, 1.442695
    %v1212 = vpow.pop %v1211
    %v1213 = vadd.f32 %v1212, 1.0
    %v1214 = vrcp.pop %v1213
    %v1215 = vmul.f32 1.0, %v1214
    %1217 = vrot.lane.b32.xlu0 %v1156, 64
    %v1218 = vpop.permute.xlu0 %1217
    %v1220 = vmul.f32 %v1215, %v1218
    %1222 = vrot.lane.b32.xlu0 %v1220, 64
    %v1223 = vpop.permute.xlu0 %1222
    %v1225 = vadd.f32 %v1208, %v1223
    %v1226 = vtanh.pop %v1225
    %v1227 = vsub.f32 1.0, %v1215
    %1229 = vrot.lane.b32.xlu0 %v1226, 96
    %v1230 = vpop.permute.xlu0 %1229
    %v1232 = vmul.f32 %v1227, %v1230
    %v1233 = vmul.f32 %v1215, %v1074
    %v1234 = vadd.f32 %v1232, %v1233
    %v1235 = vld [vmem:[#allocation5 + $0xa] sm:$0x3]
    %v1236 = vadd.f32 %v1235, %v1203
    %v1237 = vxor.u32 %v1236, 2147483648
    %v1238 = vmul.f32 %v1237, 1.442695
    %v1239 = vpow.pop %v1238
    %v1240 = vadd.f32 %v1239, 1.0
    %v1241 = vrcp.pop %v1240
    %v1242 = vmul.f32 1.0, %v1241
    %1244 = vrot.lane.b32.xlu0 %v1203, 64
    %v1245 = vpop.permute.xlu0 %1244
    %v1247 = vmul.f32 %v1242, %v1245
    %1249 = vrot.lane.b32.xlu0 %v1247, 64
    %v1250 = vpop.permute.xlu0 %1249
    %v1252 = vadd.f32 %v1235, %v1250
    %v1253 = vtanh.pop %v1252
    %v1254 = vsub.f32 1.0, %v1242
    %1256 = vrot.lane.b32.xlu0 %v1253, 96
    %v1257 = vpop.permute.xlu0 %1256
    %v1259 = vmul.f32 %v1254, %v1257
    %v1260 = vmul.f32 %v1242, %v1101
    %v1261 = vadd.f32 %v1259, %v1260
    %1263 = vrot.lane.b32.xlu0 %v1234, 96
    %v1264 = vpop.permute.xlu0 %1263
    %s1266 = scalar_lea.vmem [#allocation6], 10
    %1267 = vst.msk [vmem:[%s1266] sm:$0x3] %vm467, %v1264
    %1269 = vrot.lane.b32.xlu0 %v1261, 96
    %v1270 = vpop.permute.xlu0 %1269
    %s1272 = scalar_lea.vmem [#allocation8], 10
    %1273 = vst.msk [vmem:[%s1272] sm:$0x3] %vm467, %v1270
    %v1274 = vpack.c.bf16 %v1234, %v1234
    %1276 = vrot.lane.b32.xlu0 %v1274, 96
    %v1277 = vpop.permute.xlu0 %1276
    %v1279 = vsel %vm295, %v1277, 0
    %1281 = vmatprep.subr.bf16.mxu0 0
    %1282 = vmatpush1.bf16.msra.mxu0 %v291
    %1283 = vmatprep.subr.bf16.mxu0 0
    %1284 = vmatpush1.bf16.msra.mxu0 %v292
    %1285 = vmatprep.subr.bf16.mxu0 0
    %1286 = vmatpush1.bf16.msra.mxu0 0
    %1287 = vmatprep.subr.bf16.mxu0 0
    %1288 = vmatpush1.bf16.msra.mxu0 0
    %1289 = vmatprep.subr.bf16.mxu0 0
    %1290 = vmatpush1.bf16.msra.mxu0 0
    %1291 = vmatprep.subr.bf16.mxu0 0
    %1292 = vmatpush1.bf16.msra.mxu0 0
    %1293 = vmatprep.subr.bf16.mxu0 0
    %1294 = vmatpush1.bf16.msra.mxu0 0
    %1295 = vmatprep.subr.bf16.mxu0 0
    %1296 = vmatpush1.bf16.msra.mxu0 0
    %1297 = vmatprep.subr.bf16.mxu0 0
    %1298 = vmatpush1.bf16.msra.mxu0 0
    %1299 = vmatprep.subr.bf16.mxu0 0
    %1300 = vmatpush1.bf16.msra.mxu0 0
    %1301 = vmatprep.subr.bf16.mxu0 0
    %1302 = vmatpush1.bf16.msra.mxu0 0
    %1303 = vmatprep.subr.bf16.mxu0 0
    %1304 = vmatpush1.bf16.msra.mxu0 0
    %1305 = vmatprep.subr.bf16.mxu0 0
    %1306 = vmatpush1.bf16.msra.mxu0 0
    %1307 = vmatprep.subr.bf16.mxu0 0
    %1308 = vmatpush1.bf16.msra.mxu0 0
    %1309 = vmatprep.subr.bf16.mxu0 0
    %1310 = vmatpush1.bf16.msra.mxu0 0
    %1311 = vmatprep.subr.bf16.mxu0 0
    %1312 = vmatpush1.bf16.msra.mxu0 0
    %1313 = vmatprep.mubr.bf16.mxu0 0
    %1314 = vmatmul.mubr.bf16.gmra.mrb[0].mxu0 %v1279
    %v1315 = vpop.f32.mrb[0].mxu0
    %v1316 = vadd.f32 %v281, %v1315
    %v1317 = vpop.f32.mrb[0].mxu0
    %v1318 = vpop.f32.mrb[0].mxu0
    %v1319 = vpop.f32.mrb[0].mxu0
    %1320 = vdwg.mxu0
    %v1321 = vpack.c.bf16 %v1261, %v1261
    %1323 = vrot.lane.b32.xlu0 %v1321, 96
    %v1324 = vpop.permute.xlu0 %1323
    %v1326 = vsel %vm295, %v1324, 0
    %1328 = vmatprep.subr.bf16.mxu0 0
    %1329 = vmatpush1.bf16.msra.mxu0 %v354
    %1330 = vmatprep.subr.bf16.mxu0 0
    %1331 = vmatpush1.bf16.msra.mxu0 %v355
    %1332 = vmatprep.subr.bf16.mxu0 0
    %1333 = vmatpush1.bf16.msra.mxu0 0
    %1334 = vmatprep.subr.bf16.mxu0 0
    %1335 = vmatpush1.bf16.msra.mxu0 0
    %1336 = vmatprep.subr.bf16.mxu0 0
    %1337 = vmatpush1.bf16.msra.mxu0 0
    %1338 = vmatprep.subr.bf16.mxu0 0
    %1339 = vmatpush1.bf16.msra.mxu0 0
    %1340 = vmatprep.subr.bf16.mxu0 0
    %1341 = vmatpush1.bf16.msra.mxu0 0
    %1342 = vmatprep.subr.bf16.mxu0 0
    %1343 = vmatpush1.bf16.msra.mxu0 0
    %1344 = vmatprep.subr.bf16.mxu0 0
    %1345 = vmatpush1.bf16.msra.mxu0 0
    %1346 = vmatprep.subr.bf16.mxu0 0
    %1347 = vmatpush1.bf16.msra.mxu0 0
    %1348 = vmatprep.subr.bf16.mxu0 0
    %1349 = vmatpush1.bf16.msra.mxu0 0
    %1350 = vmatprep.subr.bf16.mxu0 0
    %1351 = vmatpush1.bf16.msra.mxu0 0
    %1352 = vmatprep.subr.bf16.mxu0 0
    %1353 = vmatpush1.bf16.msra.mxu0 0
    %1354 = vmatprep.subr.bf16.mxu0 0
    %1355 = vmatpush1.bf16.msra.mxu0 0
    %1356 = vmatprep.subr.bf16.mxu0 0
    %1357 = vmatpush1.bf16.msra.mxu0 0
    %1358 = vmatprep.subr.bf16.mxu0 0
    %1359 = vmatpush1.bf16.msra.mxu0 0
    %1360 = vmatprep.mubr.bf16.mxu0 0
    %1361 = vmatmul.mubr.bf16.gmra.mrb[0].mxu0 %v1326
    %v1362 = vpop.f32.mrb[0].mxu0
    %v1363 = vadd.f32 %v344, %v1362
    %v1364 = vpop.f32.mrb[0].mxu0
    %v1365 = vpop.f32.mrb[0].mxu0
    %v1366 = vpop.f32.mrb[0].mxu0
    %1367 = vdwg.mxu0
    %v1368 = vld [vmem:[#allocation4 + $0xc] sm:$0x3]
    %v1369 = vadd.f32 %v1368, %v1316
    %v1370 = vxor.u32 %v1369, 2147483648
    %v1371 = vmul.f32 %v1370, 1.442695
    %v1372 = vpow.pop %v1371
    %v1373 = vadd.f32 %v1372, 1.0
    %v1374 = vrcp.pop %v1373
    %v1375 = vmul.f32 1.0, %v1374
    %1377 = vrot.lane.b32.xlu0 %v1316, 64
    %v1378 = vpop.permute.xlu0 %1377
    %v1380 = vmul.f32 %v1375, %v1378
    %1382 = vrot.lane.b32.xlu0 %v1380, 64
    %v1383 = vpop.permute.xlu0 %1382
    %v1385 = vadd.f32 %v1368, %v1383
    %v1386 = vtanh.pop %v1385
    %v1387 = vsub.f32 1.0, %v1375
    %1389 = vrot.lane.b32.xlu0 %v1386, 96
    %v1390 = vpop.permute.xlu0 %1389
    %v1392 = vmul.f32 %v1387, %v1390
    %v1393 = vmul.f32 %v1375, %v1234
    %v1394 = vadd.f32 %v1392, %v1393
    %v1395 = vld [vmem:[#allocation5 + $0xc] sm:$0x3]
    %v1396 = vadd.f32 %v1395, %v1363
    %v1397 = vxor.u32 %v1396, 2147483648
    %v1398 = vmul.f32 %v1397, 1.442695
    %v1399 = vpow.pop %v1398
    %v1400 = vadd.f32 %v1399, 1.0
    %v1401 = vrcp.pop %v1400
    %v1402 = vmul.f32 1.0, %v1401
    %1404 = vrot.lane.b32.xlu0 %v1363, 64
    %v1405 = vpop.permute.xlu0 %1404
    %v1407 = vmul.f32 %v1402, %v1405
    %1409 = vrot.lane.b32.xlu0 %v1407, 64
    %v1410 = vpop.permute.xlu0 %1409
    %v1412 = vadd.f32 %v1395, %v1410
    %v1413 = vtanh.pop %v1412
    %v1414 = vsub.f32 1.0, %v1402
    %1416 = vrot.lane.b32.xlu0 %v1413, 96
    %v1417 = vpop.permute.xlu0 %1416
    %v1419 = vmul.f32 %v1414, %v1417
    %v1420 = vmul.f32 %v1402, %v1261
    %v1421 = vadd.f32 %v1419, %v1420
    %1423 = vrot.lane.b32.xlu0 %v1394, 96
    %v1424 = vpop.permute.xlu0 %1423
    %s1426 = scalar_lea.vmem [#allocation6], 12
    %1427 = vst.msk [vmem:[%s1426] sm:$0x3] %vm467, %v1424
    %1429 = vrot.lane.b32.xlu0 %v1421, 96
    %v1430 = vpop.permute.xlu0 %1429
    %s1432 = scalar_lea.vmem [#allocation8], 12
    %1433 = vst.msk [vmem:[%s1432] sm:$0x3] %vm467, %v1430
    %1434 = vst.msk [vmem:[#allocation2] sm:$0x3] %vm467, %v1424
    %1435 = vst.msk [vmem:[#allocation3] sm:$0x3] %vm467, %v1430
    // Predicated region
    $region46: #{tpu_custom_call.1} parent=1 // pred_check
      _
    $region47: #{tpu_custom_call.1} parent=1 // pred_check_branch
      %1437 = sbr.rel (0) target = $region49
    $region48: #{tpu_custom_call.1} parent=1 // pred_region
      %s1439 = ssub.s32 224, 224
      %1440 = vsyncadd [#allocation7], %s1439
      %s1441 = sshll.u32 [#allocation6], 4
      %s1442 = int_to_ptr.vmem [resolvable:$true] %s1441
      %1447 = dma.vmem_to_hbm [thread:$0]  %s1442, 224, %s10, [#allocation7], 32, 32, 2
    $region49: #{tpu_custom_call.1} parent=1 // pred_fallthru
      _
    // Predicated region
    $region50: #{tpu_custom_call.1} parent=1 // pred_check
      _
    $region51: #{tpu_custom_call.1} parent=1 // pred_check_branch
      %1449 = sbr.rel (0) target = $region53
    $region52: #{tpu_custom_call.1} parent=1 // pred_region
      %s1451 = ssub.s32 224, 224
      %1452 = vsyncadd [#allocation9], %s1451
      %s1453 = sshll.u32 [#allocation8], 4
      %s1454 = int_to_ptr.vmem [resolvable:$true] %s1453
      %1459 = dma.vmem_to_hbm [thread:$0]  %s1454, 224, %s11, [#allocation9], 32, 32, 2
    $region53: #{tpu_custom_call.1} parent=1 // pred_fallthru
      _
    // Predicated region
    $region54: #{tpu_custom_call.1} parent=1 // pred_check
      _
    $region55: #{tpu_custom_call.1} parent=1 // pred_check_branch
      %1461 = sbr.rel (0) target = $region57
    $region56: #{tpu_custom_call.1} parent=1 // pred_region
      %1462 = dma.done [#allocation7], 224
    $region57: #{tpu_custom_call.1} parent=1 // pred_fallthru
      _
    // Predicated region
    $region58: #{tpu_custom_call.1} parent=1 // pred_check
      _
    $region59: #{tpu_custom_call.1} parent=1 // pred_check_branch
      %1464 = sbr.rel (0) target = $region61
    $region60: #{tpu_custom_call.1} parent=1 // pred_region
      %1465 = dma.done [#allocation9], 224
    $region61: #{tpu_custom_call.1} parent=1 // pred_fallthru
      _
    %1466 = vsyncpa [#allocation7], 1
    %1467 = vsyncpa [#allocation9], 1

</llo_original>
